<compile_context>
chip_gen: v7x
topology: tpu7x:2x2x1
jax: 0.10.0
libtpu: 0.0.40
codegen_flags: <defaults>
</compile_context>

<pallas_src>
import functools

import jax
import jax.numpy as jnp
from jax.experimental import pallas as pl
from jax.experimental.pallas import tpu as pltpu

LEAKY_SLOPE = 0.01  # PyTorch nn.LeakyReLU default negative_slope


def _leaky_relu(x):
    return jnp.where(x > 0, x, LEAKY_SLOPE * x)


def net_kernel(x_ref, w1_ref, b1_ref, w2_ref, b2_ref, w3_ref, b3_ref, o_ref):
    """One batch tile of the MLP in natural (batch, feature) layout.

    x_ref : (tile_b, input_dim)
    wN    : (in_features, out_features)   math layout (x @ W + b)
    bN    : (1, out_features)             f32, added after the f32 accumulate
    o_ref : (tile_b, out_dim)
    """
    x = x_ref[...].astype(w1_ref.dtype)

    # featurize: Linear(input_dim -> hidden); f32 MXU accumulation.
    h = jnp.dot(x, w1_ref[...], preferred_element_type=jnp.float32) + b1_ref[...]

    # internal_layers: LeakyReLU -> Linear(hidden -> hidden) -> LeakyReLU.
    # Elementwise math stays f32 (v5e has no bf16 VPU/EUP path); cast back to
    # the storage dtype only for the next MXU op.
    h = _leaky_relu(h)
    h = jnp.dot(h.astype(w2_ref.dtype), w2_ref[...],
                preferred_element_type=jnp.float32) + b2_ref[...]
    h = _leaky_relu(h)

    # final_internal_layer: Linear(hidden -> out), then tanh ('s' layer type).
    h = jnp.dot(h.astype(w3_ref.dtype), w3_ref[...],
                preferred_element_type=jnp.float32) + b3_ref[...]
    o_ref[...] = jnp.tanh(h).astype(o_ref.dtype)


def _pick_tile_b(batch, requested):
    """Largest tile <= requested (multiple of 128) that keeps >= 2 grid steps
    when the batch allows — so v7x's two TensorCores both get work."""
    assert requested % 128 == 0 and requested >= 128, \
        "tile_b must be a multiple of 128 (second-minor axis)"
    tb = requested
    while tb > 128 and -(-batch // tb) < 2:
        tb = max(128, (tb // 2) // 128 * 128)
    return tb


def _vmem_bytes_estimate(tile_b, x_itemsize, out_itemsize):
    # Double-buffered x / out tiles plus ~3 f32 intermediate slabs.  Feature
    # dims (<=32) pad to a full 128-lane tile in VMEM, hence the 128 factor.
    return tile_b * 128 * (2 * x_itemsize + 2 * out_itemsize + 3 * 4)


@functools.partial(jax.jit, static_argnames=("tile_b", "use_bf16"))
def net_forward(x, w1, b1, w2, b2, w3, b3, *, tile_b=2048, use_bf16=False):
    """Forward pass of Net (num_layers=3, 's' type, tanh output, no BN/skip).

    x : (B, input_dim)
    wN: (in_features, out_features)   (math layout: x @ wN + bN)
    bN: (1, out_features) or (out_features,)
    Returns (B, out_dim) in x.dtype.
    """
    B, input_dim = x.shape
    hidden = w1.shape[1]
    out_dim = w3.shape[1]

    compute_dtype = jnp.bfloat16 if use_bf16 else jnp.float32

    # Weights are tiny; cast wrapper-side.  Biases stay f32 (added after the
    # f32 MXU accumulate).
    w1c = w1.astype(compute_dtype)
    w2c = w2.astype(compute_dtype)
    w3c = w3.astype(compute_dtype)
    b1c = b1.reshape(1, hidden).astype(jnp.float32)
    b2c = b2.reshape(1, hidden).astype(jnp.float32)
    b3c = b3.reshape(1, out_dim).astype(jnp.float32)

    tb = _pick_tile_b(B, tile_b)
    n_tiles = pl.cdiv(B, tb)          # ragged last tile handled by Pallas

    # x / output tiled over the batch axis; weights & biases VMEM-resident
    # across the whole grid (constant index_map -> fetched once).
    x_spec = pl.BlockSpec((tb, input_dim), lambda i: (i, 0))
    w1_spec = pl.BlockSpec((input_dim, hidden), lambda i: (0, 0))
    b1_spec = pl.BlockSpec((1, hidden), lambda i: (0, 0))
    w2_spec = pl.BlockSpec((hidden, hidden), lambda i: (0, 0))
    b2_spec = pl.BlockSpec((1, hidden), lambda i: (0, 0))
    w3_spec = pl.BlockSpec((hidden, out_dim), lambda i: (0, 0))
    b3_spec = pl.BlockSpec((1, out_dim), lambda i: (0, 0))
    o_spec = pl.BlockSpec((tb, out_dim), lambda i: (i, 0))

    cp_kwargs = dict(
        # Batch tiles are independent -> v7x shards them across its 2 TCs.
        dimension_semantics=("parallel",),
    )
    vmem_est = _vmem_bytes_estimate(tb, x.dtype.itemsize, x.dtype.itemsize)
    if vmem_est > 12 * 1024 * 1024:
        # Only needed for very large tiles on v5e's 16 MiB scoped default.
        cp_kwargs["vmem_limit_bytes"] = int(
            min(max(2 * vmem_est, 32 * 1024 * 1024), 48 * 1024 * 1024))

    out = pl.pallas_call(
        net_kernel,
        out_shape=jax.ShapeDtypeStruct((B, out_dim), x.dtype),
        grid_spec=pltpu.PrefetchScalarGridSpec(
            num_scalar_prefetch=0,
            grid=(n_tiles,),
            in_specs=[x_spec, w1_spec, b1_spec, w2_spec, b2_spec,
                      w3_spec, b3_spec],
            out_specs=o_spec,
        ),
        compiler_params=pltpu.CompilerParams(**cp_kwargs),
    )(x, w1c, b1c, w2c, b2c, w3c, b3c)

    return out


def _reference(x, w1, b1, w2, b2, w3, b3):
    h = x @ w1 + b1
    h = _leaky_relu(h)
    h = h @ w2 + b2
    h = _leaky_relu(h)
    h = h @ w3 + b3
    return jnp.tanh(h)


if __name__ == "__main__":
    # Small feature dims consistent with the module (input_dim=8, hidden=32);
    # non-multiple batch exercises the ragged last tile and gives a 2-step
    # parallel grid (tile picker: 2048 -> 512 for B=1000).
    B, input_dim, hidden = 1000, 8, 32
    out_dim = input_dim  # output_dim=None -> out = input_dim

    key = jax.random.PRNGKey(0)
    kx, k1, k2, k3, kb1, kb2, kb3 = jax.random.split(key, 7)

    x = jax.random.normal(kx, (B, input_dim), dtype=jnp.float32)

    # Deterministic parameter init (uniform, like torch Linear default bounds).
    def init_linear(kw, kb, fan_in, fan_out):
        bound = 1.0 / float(jnp.sqrt(fan_in))
        w = jax.random.uniform(kw, (fan_in, fan_out), jnp.float32, -bound, bound)
        b = jax.random.uniform(kb, (1, fan_out), jnp.float32, -bound, bound)
        return w, b

    w1, b1 = init_linear(k1, kb1, input_dim, hidden)
    w2, b2 = init_linear(k2, kb2, hidden, hidden)
    w3, b3 = init_linear(k3, kb3, hidden, out_dim)

    ref = _reference(x, w1, b1, w2, b2, w3, b3)

    # Default f32 path: matches PyTorch numerics, tight tolerance.
    out = jax.block_until_ready(net_forward(x, w1, b1, w2, b2, w3, b3))
    assert out.shape == (B, out_dim)
    assert out.dtype == x.dtype
    assert jnp.allclose(out, ref, atol=1e-5, rtol=1e-5)

    # bf16 storage/compute path (halves x/weight HBM bytes when the caller
    # supplies bf16 activations; biggest relative win on v5e's lower HBM BW).
    x_bf16 = x.astype(jnp.bfloat16)
    out_bf16 = jax.block_until_ready(
        net_forward(x_bf16, w1, b1, w2, b2, w3, b3, use_bf16=True))
    assert out_bf16.shape == (B, out_dim)
    assert jnp.allclose(out_bf16.astype(jnp.float32), ref, atol=5e-2, rtol=5e-2)

    print("KERNEL_OK")
</pallas_src>

<mosaic_0001>
module attributes {stable_mosaic.version = 11 : i64} {
  func.func @net_kernel(%arg0: i32, %arg1: memref<512x8xf32, #tpu.memory_space<vmem>>, %arg2: memref<8x32xf32, #tpu.memory_space<vmem>>, %arg3: memref<1x32xf32, #tpu.memory_space<vmem>>, %arg4: memref<32x32xf32, #tpu.memory_space<vmem>>, %arg5: memref<1x32xf32, #tpu.memory_space<vmem>>, %arg6: memref<32x8xf32, #tpu.memory_space<vmem>>, %arg7: memref<1x8xf32, #tpu.memory_space<vmem>>, %arg8: memref<512x8xf32, #tpu.memory_space<vmem>>) attributes {dimension_semantics = [#tpu.dimension_semantics<parallel>], iteration_bounds = array<i64: 2>, scalar_prefetch = 0 : i64, scratch_operands = 0 : i64, tpu.core_type = #tpu.core_type<tc>, window_params = [{transform_indices = @transform_0, window_bounds = array<i64: 512, 8>}, {pipeline_mode = #tpu.pipeline_mode<synchronous>, transform_indices = @transform_1, window_bounds = array<i64: 8, 32>}, {pipeline_mode = #tpu.pipeline_mode<synchronous>, transform_indices = @transform_2, window_bounds = array<i64: 1, 32>}, {pipeline_mode = #tpu.pipeline_mode<synchronous>, transform_indices = @transform_3, window_bounds = array<i64: 32, 32>}, {pipeline_mode = #tpu.pipeline_mode<synchronous>, transform_indices = @transform_4, window_bounds = array<i64: 1, 32>}, {pipeline_mode = #tpu.pipeline_mode<synchronous>, transform_indices = @transform_5, window_bounds = array<i64: 32, 8>}, {pipeline_mode = #tpu.pipeline_mode<synchronous>, transform_indices = @transform_6, window_bounds = array<i64: 1, 8>}, {transform_indices = @transform_7, window_bounds = array<i64: 512, 8>}]} {
    %c0 = arith.constant 0 : index
    %c0_0 = arith.constant 0 : index
    %0 = vector.load %arg1[%c0, %c0_0] : memref<512x8xf32, #tpu.memory_space<vmem>>, vector<512x8xf32>
    %c0_1 = arith.constant 0 : index
    %c0_2 = arith.constant 0 : index
    %1 = vector.load %arg2[%c0_1, %c0_2] : memref<8x32xf32, #tpu.memory_space<vmem>>, vector<8x32xf32>
    %cst = arith.constant dense<0.000000e+00> : vector<512x32xf32>
    %2 = tpu.matmul %0, %1, %cst {dimension_numbers = #tpu.dot_dimension_numbers<[1], [0], [0], [1], [0, 0, 1, 1], [], []>} : vector<512x8xf32>, vector<8x32xf32>, vector<512x32xf32> -> vector<512x32xf32>
    %c0_3 = arith.constant 0 : index
    %c0_4 = arith.constant 0 : index
    %3 = vector.load %arg3[%c0_3, %c0_4] : memref<1x32xf32, #tpu.memory_space<vmem>>, vector<1x32xf32>
    %4 = vector.broadcast %3 : vector<1x32xf32> to vector<512x32xf32>
    %5 = arith.addf %2, %4 : vector<512x32xf32>
    %cst_5 = arith.constant 0.000000e+00 : f32
    %6 = vector.broadcast %cst_5 : f32 to vector<512x32xf32>
    %7 = arith.cmpf ogt, %5, %6 : vector<512x32xf32>
    %cst_6 = arith.constant 0.00999999977 : f32
    %8 = vector.broadcast %cst_6 : f32 to vector<512x32xf32>
    %9 = arith.mulf %8, %5 : vector<512x32xf32>
    %10 = arith.select %7, %5, %9 : vector<512x32xi1>, vector<512x32xf32>
    %c0_7 = arith.constant 0 : index
    %c0_8 = arith.constant 0 : index
    %11 = vector.load %arg4[%c0_7, %c0_8] : memref<32x32xf32, #tpu.memory_space<vmem>>, vector<32x32xf32>
    %cst_9 = arith.constant dense<0.000000e+00> : vector<512x32xf32>
    %12 = tpu.matmul %10, %11, %cst_9 {dimension_numbers = #tpu.dot_dimension_numbers<[1], [0], [0], [1], [0, 0, 1, 1], [], []>} : vector<512x32xf32>, vector<32x32xf32>, vector<512x32xf32> -> vector<512x32xf32>
    %c0_10 = arith.constant 0 : index
    %c0_11 = arith.constant 0 : index
    %13 = vector.load %arg5[%c0_10, %c0_11] : memref<1x32xf32, #tpu.memory_space<vmem>>, vector<1x32xf32>
    %14 = vector.broadcast %13 : vector<1x32xf32> to vector<512x32xf32>
    %15 = arith.addf %12, %14 : vector<512x32xf32>
    %cst_12 = arith.constant 0.000000e+00 : f32
    %16 = vector.broadcast %cst_12 : f32 to vector<512x32xf32>
    %17 = arith.cmpf ogt, %15, %16 : vector<512x32xf32>
    %cst_13 = arith.constant 0.00999999977 : f32
    %18 = vector.broadcast %cst_13 : f32 to vector<512x32xf32>
    %19 = arith.mulf %18, %15 : vector<512x32xf32>
    %20 = arith.select %17, %15, %19 : vector<512x32xi1>, vector<512x32xf32>
    %c0_14 = arith.constant 0 : index
    %c0_15 = arith.constant 0 : index
    %21 = vector.load %arg6[%c0_14, %c0_15] : memref<32x8xf32, #tpu.memory_space<vmem>>, vector<32x8xf32>
    %cst_16 = arith.constant dense<0.000000e+00> : vector<512x8xf32>
    %22 = tpu.matmul %20, %21, %cst_16 {dimension_numbers = #tpu.dot_dimension_numbers<[1], [0], [0], [1], [0, 0, 1, 1], [], []>} : vector<512x32xf32>, vector<32x8xf32>, vector<512x8xf32> -> vector<512x8xf32>
    %c0_17 = arith.constant 0 : index
    %c0_18 = arith.constant 0 : index
    %23 = vector.load %arg7[%c0_17, %c0_18] : memref<1x8xf32, #tpu.memory_space<vmem>>, vector<1x8xf32>
    %24 = vector.broadcast %23 : vector<1x8xf32> to vector<512x8xf32>
    %25 = arith.addf %22, %24 : vector<512x8xf32>
    %26 = math.tanh %25 : vector<512x8xf32>
    %c0_19 = arith.constant 0 : index
    %c0_20 = arith.constant 0 : index
    %27 = vector.load %arg8[%c0_19, %c0_20] : memref<512x8xf32, #tpu.memory_space<vmem>>, vector<512x8xf32>
    tpu.vector_store %arg8[%c0_19, %c0_20], %26 {strides = array<i32>} : memref<512x8xf32, #tpu.memory_space<vmem>>, vector<512x8xf32>,
    return
  }
  func.func @transform_0(%arg0: i32) -> (i32, i32) {
    %c0_i32 = arith.constant 0 : i32
    %c0_i32_0 = arith.constant 0 : i32
    return %arg0, %c0_i32 : i32, i32
  }
  func.func @transform_1(%arg0: i32) -> (i32, i32) {
    %c0_i32 = arith.constant 0 : i32
    %c0_i32_0 = arith.constant 0 : i32
    %c0_i32_1 = arith.constant 0 : i32
    return %c0_i32, %c0_i32_0 : i32, i32
  }
  func.func @transform_2(%arg0: i32) -> (i32, i32) {
    %c0_i32 = arith.constant 0 : i32
    %c0_i32_0 = arith.constant 0 : i32
    %c0_i32_1 = arith.constant 0 : i32
    return %c0_i32, %c0_i32_0 : i32, i32
  }
  func.func @transform_3(%arg0: i32) -> (i32, i32) {
    %c0_i32 = arith.constant 0 : i32
    %c0_i32_0 = arith.constant 0 : i32
    %c0_i32_1 = arith.constant 0 : i32
    return %c0_i32, %c0_i32_0 : i32, i32
  }
  func.func @transform_4(%arg0: i32) -> (i32, i32) {
    %c0_i32 = arith.constant 0 : i32
    %c0_i32_0 = arith.constant 0 : i32
    %c0_i32_1 = arith.constant 0 : i32
    return %c0_i32, %c0_i32_0 : i32, i32
  }
  func.func @transform_5(%arg0: i32) -> (i32, i32) {
    %c0_i32 = arith.constant 0 : i32
    %c0_i32_0 = arith.constant 0 : i32
    %c0_i32_1 = arith.constant 0 : i32
    return %c0_i32, %c0_i32_0 : i32, i32
  }
  func.func @transform_6(%arg0: i32) -> (i32, i32) {
    %c0_i32 = arith.constant 0 : i32
    %c0_i32_0 = arith.constant 0 : i32
    %c0_i32_1 = arith.constant 0 : i32
    return %c0_i32, %c0_i32_0 : i32, i32
  }
  func.func @transform_7(%arg0: i32) -> (i32, i32) {
    %c0_i32 = arith.constant 0 : i32
    %c0_i32_0 = arith.constant 0 : i32
    return %arg0, %c0_i32 : i32, i32
  }
}

</mosaic_0001>

<llo_original>
// kernel: net_forward.1
$region0: #{net_forward.1}
  #allocation0 [shape = 'u32[]', space=smem, size = 0x4, offset = 0x4, fixed_abs, tag = 'smem constant byte address 0x4 - core index']
  #allocation1 [shape = 'u32[144,128]{1,0:T(1,128)}', space=vmem, size = 0x12000, scoped, tag = 'internal scratch']
  %s0 = inlined_call_operand.vmem [shape: f32[1000,8], index: 0, kind: input, shape index: {}]
  %s1 = inlined_call_operand.vmem [shape: f32[8,32], index: 1, kind: input, shape index: {}]
  %s2 = inlined_call_operand.vmem [shape: f32[1,32], index: 2, kind: input, shape index: {}]
  %s3 = inlined_call_operand.vmem [shape: f32[32,32], index: 3, kind: input, shape index: {}]
  %s4 = inlined_call_operand.vmem [shape: f32[1,32], index: 4, kind: input, shape index: {}]
  %s5 = inlined_call_operand.vmem [shape: f32[32,8], index: 5, kind: input, shape index: {}]
  %s6 = inlined_call_operand.vmem [shape: f32[1,8], index: 6, kind: input, shape index: {}]
  %s7 = inlined_call_operand.vmem [shape: f32[1000,8], index: 7, kind: output, shape index: {}]
  %s8 = sld [smem:[#allocation0]]
  $region109: #{net_forward.1} parent=0
    _
  %s10 = ssub.s32 1, %s8
  %s11 = scalar_select 0, %s10, %s8
  $region1: #{net_forward.1} parent=0
    #allocation2 [shape = 'u8[524288]{0}', space=vmem, size = 0x80000, scoped, tag = 'output window, operand 0']
    loop: start=0, step=1, limit=4
    $region2: #{net_forward.1} parent=1 // loop_pre_header
      _
    $region3: #{net_forward.1} parent=1 // loop_header
      %s13 = sphi 0, %s17
      %p14 = scmp.ge.s32.totalorder %s13, 4
      %s23 = sphi 0, %s25
      %s26 = sphi 0, %s23
      %s27 = sphi 0, %s26
      %s43 = sphi 0, %s27
      %s47 = sphi 0, %s47
      %s49 = sphi 0, %s47
      %s50 = sphi 0, %s49
      %s64 = sphi 0, %s50
      %s68 = sphi 0, %s68
      %s70 = sphi 0, %s68
      %s71 = sphi 0, %s70
      %s85 = sphi 0, %s71
      %s89 = sphi 0, %s89
      %s91 = sphi 0, %s89
      %s92 = sphi 0, %s91
      %s106 = sphi 0, %s92
      %s110 = sphi 0, %s110
      %s112 = sphi 0, %s110
      %s113 = sphi 0, %s112
      %s127 = sphi 0, %s113
      %s131 = sphi 0, %s131
      %s133 = sphi 0, %s131
      %s134 = sphi 0, %s133
      %s148 = sphi 0, %s134
      %s152 = sphi 0, %s152
      %s154 = sphi 0, %s152
      %s155 = sphi 0, %s154
      %s169 = sphi 0, %s155
      %s175 = sphi 0, %s177
      %s178 = sphi 0, %s175
      %s179 = sphi 0, %s178
      %s195 = sphi 0, %s179
    $region4: #{net_forward.1} parent=1 // loop_header_branch
      %16 = sbr.rel (%p14) target = $region8
    $region5: #{net_forward.1} parent=1 // loop_body
      %s18 = ssub.s32 %s13, 1
      %s19 = ssub.s32 %s13, 2
      %s20 = sadd.s32 %s13, 1
      %s21 = ssub.s32 %s13, %s20
      %p22 = scmp.eq.s32.totalorder %s21, 0
      %s24 = sadd.s32 %s23, 1
      %s25 = scalar_select %p22, %s23, %s24
      %p28 = pneg %p22
      %p29 = scmp.eq.s32.totalorder %s13, 1
      %p30 = por %p28, %p29
      %p31 = scmp.ne.s32.totalorder %s23, %s26
      %p32 = scmp.eq.s32.totalorder %s13, 0
      %p33 = por %p31, %p32
      %p34 = scmp.ne.s32.totalorder %s23, %s26
      %p35 = scmp.eq.s32.totalorder %s18, 1
      %p36 = por %p34, %p35
      %p37 = scmp.ne.s32.totalorder %s26, %s27
      %p38 = scmp.eq.s32.totalorder %s18, 0
      %p39 = por %p37, %p38
      %p40 = scmp.ne.s32.totalorder %s26, %s27
      %p41 = scmp.eq.s32.totalorder %s19, 1
      %p42 = por %p40, %p41
      %p44 = scmp.ne.s32.totalorder %s27, %s43
      %p45 = scmp.eq.s32.totalorder %s19, 0
      %p46 = por %p44, %p45
      %s48 = sadd.s32 %s47, 1
      %p51 = scmp.eq.s32.totalorder %s13, 1
      %p52 = scmp.ne.s32.totalorder %s47, %s49
      %p53 = scmp.eq.s32.totalorder %s13, 0
      %p54 = por %p52, %p53
      %p55 = scmp.ne.s32.totalorder %s47, %s49
      %p56 = scmp.eq.s32.totalorder %s18, 1
      %p57 = por %p55, %p56
      %p58 = scmp.ne.s32.totalorder %s49, %s50
      %p59 = scmp.eq.s32.totalorder %s18, 0
      %p60 = por %p58, %p59
      %p61 = scmp.ne.s32.totalorder %s49, %s50
      %p62 = scmp.eq.s32.totalorder %s19, 1
      %p63 = por %p61, %p62
      %p65 = scmp.ne.s32.totalorder %s50, %s64
      %p66 = scmp.eq.s32.totalorder %s19, 0
      %p67 = por %p65, %p66
      %s69 = sadd.s32 %s68, 1
      %p72 = scmp.eq.s32.totalorder %s13, 1
      %p73 = scmp.ne.s32.totalorder %s68, %s70
      %p74 = scmp.eq.s32.totalorder %s13, 0
      %p75 = por %p73, %p74
      %p76 = scmp.ne.s32.totalorder %s68, %s70
      %p77 = scmp.eq.s32.totalorder %s18, 1
      %p78 = por %p76, %p77
      %p79 = scmp.ne.s32.totalorder %s70, %s71
      %p80 = scmp.eq.s32.totalorder %s18, 0
      %p81 = por %p79, %p80
      %p82 = scmp.ne.s32.totalorder %s70, %s71
      %p83 = scmp.eq.s32.totalorder %s19, 1
      %p84 = por %p82, %p83
      %p86 = scmp.ne.s32.totalorder %s71, %s85
      %p87 = scmp.eq.s32.totalorder %s19, 0
      %p88 = por %p86, %p87
      %s90 = sadd.s32 %s89, 1
      %p93 = scmp.eq.s32.totalorder %s13, 1
      %p94 = scmp.ne.s32.totalorder %s89, %s91
      %p95 = scmp.eq.s32.totalorder %s13, 0
      %p96 = por %p94, %p95
      %p97 = scmp.ne.s32.totalorder %s89, %s91
      %p98 = scmp.eq.s32.totalorder %s18, 1
      %p99 = por %p97, %p98
      %p100 = scmp.ne.s32.totalorder %s91, %s92
      %p101 = scmp.eq.s32.totalorder %s18, 0
      %p102 = por %p100, %p101
      %p103 = scmp.ne.s32.totalorder %s91, %s92
      %p104 = scmp.eq.s32.totalorder %s19, 1
      %p105 = por %p103, %p104
      %p107 = scmp.ne.s32.totalorder %s92, %s106
      %p108 = scmp.eq.s32.totalorder %s19, 0
      %p109 = por %p107, %p108
      %s111 = sadd.s32 %s110, 1
      %p114 = scmp.eq.s32.totalorder %s13, 1
      %p115 = scmp.ne.s32.totalorder %s110, %s112
      %p116 = scmp.eq.s32.totalorder %s13, 0
      %p117 = por %p115, %p116
      %p118 = scmp.ne.s32.totalorder %s110, %s112
      %p119 = scmp.eq.s32.totalorder %s18, 1
      %p120 = por %p118, %p119
      %p121 = scmp.ne.s32.totalorder %s112, %s113
      %p122 = scmp.eq.s32.totalorder %s18, 0
      %p123 = por %p121, %p122
      %p124 = scmp.ne.s32.totalorder %s112, %s113
      %p125 = scmp.eq.s32.totalorder %s19, 1
      %p126 = por %p124, %p125
      %p128 = scmp.ne.s32.totalorder %s113, %s127
      %p129 = scmp.eq.s32.totalorder %s19, 0
      %p130 = por %p128, %p129
      %s132 = sadd.s32 %s131, 1
      %p135 = scmp.eq.s32.totalorder %s13, 1
      %p136 = scmp.ne.s32.totalorder %s131, %s133
      %p137 = scmp.eq.s32.totalorder %s13, 0
      %p138 = por %p136, %p137
      %p139 = scmp.ne.s32.totalorder %s131, %s133
      %p140 = scmp.eq.s32.totalorder %s18, 1
      %p141 = por %p139, %p140
      %p142 = scmp.ne.s32.totalorder %s133, %s134
      %p143 = scmp.eq.s32.totalorder %s18, 0
      %p144 = por %p142, %p143
      %p145 = scmp.ne.s32.totalorder %s133, %s134
      %p146 = scmp.eq.s32.totalorder %s19, 1
      %p147 = por %p145, %p146
      %p149 = scmp.ne.s32.totalorder %s134, %s148
      %p150 = scmp.eq.s32.totalorder %s19, 0
      %p151 = por %p149, %p150
      %s153 = sadd.s32 %s152, 1
      %p156 = scmp.eq.s32.totalorder %s13, 1
      %p157 = scmp.ne.s32.totalorder %s152, %s154
      %p158 = scmp.eq.s32.totalorder %s13, 0
      %p159 = por %p157, %p158
      %p160 = scmp.ne.s32.totalorder %s152, %s154
      %p161 = scmp.eq.s32.totalorder %s18, 1
      %p162 = por %p160, %p161
      %p163 = scmp.ne.s32.totalorder %s154, %s155
      %p164 = scmp.eq.s32.totalorder %s18, 0
      %p165 = por %p163, %p164
      %p166 = scmp.ne.s32.totalorder %s154, %s155
      %p167 = scmp.eq.s32.totalorder %s19, 1
      %p168 = por %p166, %p167
      %p170 = scmp.ne.s32.totalorder %s155, %s169
      %p171 = scmp.eq.s32.totalorder %s19, 0
      %p172 = por %p170, %p171
      %s173 = ssub.s32 %s13, %s20
      %p174 = scmp.eq.s32.totalorder %s173, 0
      %s176 = sadd.s32 %s175, 1
      %s177 = scalar_select %p174, %s175, %s176
      %p180 = pneg %p174
      %p181 = scmp.eq.s32.totalorder %s13, 1
      %p182 = por %p180, %p181
      %p183 = scmp.ne.s32.totalorder %s175, %s178
      %p184 = scmp.eq.s32.totalorder %s13, 0
      %p185 = por %p183, %p184
      %p186 = scmp.ne.s32.totalorder %s175, %s178
      %p187 = scmp.eq.s32.totalorder %s18, 1
      %p188 = por %p186, %p187
      %p189 = scmp.ne.s32.totalorder %s178, %s179
      %p190 = scmp.eq.s32.totalorder %s18, 0
      %p191 = por %p189, %p190
      %p192 = scmp.ne.s32.totalorder %s178, %s179
      %p193 = scmp.eq.s32.totalorder %s19, 1
      %p194 = por %p192, %p193
      %p196 = scmp.ne.s32.totalorder %s179, %s195
      %p197 = scmp.eq.s32.totalorder %s19, 0
      %p198 = por %p196, %p197
      %p199 = scmp.le.s32.totalorder 1, %s13
      %p200 = scmp.lt.s32.totalorder %s13, 3
      %p201 = pnand %p199, %p200
      %p202 = pneg %p201
      // Predicated region
      $region9: #{net_forward.1} parent=5 // pred_check
        _
      $region10: #{net_forward.1} parent=5 // pred_check_branch
        %204 = sbr.rel (%p201) target = $region12
      $region11: #{net_forward.1} parent=5 // pred_region
        %s205 = ssub.s32 %s13, 1
        // Predicated region
        $region13: #{net_forward.1} parent=11 // pred_check
          %p206 = pneg %p60
        $region14: #{net_forward.1} parent=11 // pred_check_branch
          %208 = sbr.rel (%p206) target = $region16
        $region15: #{net_forward.1} parent=11 // pred_region
          _
        $region16: #{net_forward.1} parent=11 // pred_fallthru
          _
        // Predicated region
        $region17: #{net_forward.1} parent=11 // pred_check
          %p209 = pneg %p81
        $region18: #{net_forward.1} parent=11 // pred_check_branch
          %211 = sbr.rel (%p209) target = $region20
        $region19: #{net_forward.1} parent=11 // pred_region
          _
        $region20: #{net_forward.1} parent=11 // pred_fallthru
          _
        // Predicated region
        $region21: #{net_forward.1} parent=11 // pred_check
          %p212 = pneg %p102
        $region22: #{net_forward.1} parent=11 // pred_check_branch
          %214 = sbr.rel (%p212) target = $region24
        $region23: #{net_forward.1} parent=11 // pred_region
          _
        $region24: #{net_forward.1} parent=11 // pred_fallthru
          _
        // Predicated region
        $region25: #{net_forward.1} parent=11 // pred_check
          %p215 = pneg %p123
        $region26: #{net_forward.1} parent=11 // pred_check_branch
          %217 = sbr.rel (%p215) target = $region28
        $region27: #{net_forward.1} parent=11 // pred_region
          _
        $region28: #{net_forward.1} parent=11 // pred_fallthru
          _
        // Predicated region
        $region29: #{net_forward.1} parent=11 // pred_check
          %p218 = pneg %p144
        $region30: #{net_forward.1} parent=11 // pred_check_branch
          %220 = sbr.rel (%p218) target = $region32
        $region31: #{net_forward.1} parent=11 // pred_region
          _
        $region32: #{net_forward.1} parent=11 // pred_fallthru
          _
        // Predicated region
        $region33: #{net_forward.1} parent=11 // pred_check
          %p221 = pneg %p165
        $region34: #{net_forward.1} parent=11 // pred_check_branch
          %223 = sbr.rel (%p221) target = $region36
        $region35: #{net_forward.1} parent=11 // pred_region
          _
        $region36: #{net_forward.1} parent=11 // pred_fallthru
          _
      $region12: #{net_forward.1} parent=5 // pred_fallthru
        _
      %p224 = scmp.lt.s32.totalorder %s13, 2
      // Predicated region
      $region37: #{net_forward.1} parent=5 // pred_check
        %p225 = pneg %p224
      $region38: #{net_forward.1} parent=5 // pred_check_branch
        %227 = sbr.rel (%p225) target = $region40
      $region39: #{net_forward.1} parent=5 // pred_region
        // Predicated region
        $region41: #{net_forward.1} parent=39 // pred_check
          %p228 = pneg %p33
        $region42: #{net_forward.1} parent=39 // pred_check_branch
          %230 = sbr.rel (%p228) target = $region44
        $region43: #{net_forward.1} parent=39 // pred_region
          %s231 = smul.u32 64, %s13
          %s232 = ssub.s32 125, %s231
          %p233 = scmp.lt.s32.totalorder %s232, 64
          %s234 = scalar_select %p233, %s232, 64
          %s235 = smul.u32 128, %s234
          %p236 = scmp.lt.s32.totalorder %s231, 124
          %s237 = scalar_select %p236, %s231, 124
          %s238 = smul.addr %s237, 8
          %s239 = scalar_lea.vmem %s0, %s238
          %s240 = smul.u32 64, %s13
          %s241 = ssub.s32 125, %s240
          %p242 = scmp.lt.s32.totalorder %s241, 64
          %s243 = scalar_select %p242, %s241, 64
          %s244 = smul.u32 128, %s243
        $region44: #{net_forward.1} parent=39 // pred_fallthru
          _
      $region40: #{net_forward.1} parent=5 // pred_fallthru
        _
      %p245 = scmp.le.s32.totalorder 1, %s13
      %p246 = scmp.lt.s32.totalorder %s13, 3
      %p247 = pnand %p245, %p246
      %p248 = pneg %p247
      // Predicated region
      $region45: #{net_forward.1} parent=5 // pred_check
        _
      $region46: #{net_forward.1} parent=5 // pred_check_branch
        %250 = sbr.rel (%p247) target = $region48
      $region47: #{net_forward.1} parent=5 // pred_region
        %s251 = ssub.s32 %s13, 1
        %s252 = smul.u32 64, %s18
        %s253 = ssub.s32 125, %s252
        %p254 = scmp.lt.s32.totalorder %s253, 64
        %s255 = scalar_select %p254, %s253, 64
        %s256 = smul.u32 128, %s255
        %p257 = scmp.lt.s32.totalorder %s252, 124
        %s258 = scalar_select %p257, %s252, 124
        %s259 = smul.addr %s258, 8
        %s260 = scalar_lea.vmem %s0, %s259
        %p261 = pneg %p39
        %p262 = pneg %p36
        %p263 = pneg %p60
        %p264 = pneg %p57
        %p265 = pneg %p81
        %p266 = pneg %p78
        %p267 = pneg %p102
        %p268 = pneg %p99
        %p269 = pneg %p123
        %p270 = pneg %p120
        %p271 = pneg %p144
        %p272 = pneg %p141
        %p273 = pneg %p165
        %p274 = pneg %p162
        %p275 = pneg %p191
        %p276 = pneg %p188
        %s277 = sand.u32 %s178, 1
        %s278 = sand.u32 %s178, 1
        %s279 = smul.addr %s278, 512
        %s280 = scalar_lea.vmem [#allocation2], %s279
        %s281 = smul.u32 64, %s18
        %s282 = ssub.s32 125, %s281
        %p283 = scmp.lt.s32.totalorder %s282, 64
        %s284 = scalar_select %p283, %s282, 64
        %s285 = smul.u32 128, %s284
        %p286 = scmp.lt.s32.totalorder %s281, 124
        %s287 = scalar_select %p286, %s281, 124
        %s288 = smul.addr %s287, 8
        %s289 = scalar_lea.vmem %s0, %s288
        %s290 = smul.u32 64, %s18
        %s291 = ssub.s32 125, %s290
        %p292 = scmp.lt.s32.totalorder %s291, 64
        %s293 = scalar_select %p292, %s291, 64
        %s294 = smul.u32 128, %s293
        %s295 = smul.u32 64, %s18
        %s296 = ssub.s32 125, %s295
        %p297 = scmp.lt.s32.totalorder %s296, 64
        %s298 = scalar_select %p297, %s296, 64
        %s299 = smul.u32 128, %s298
        %v300 = vld [vmem:[%s289] sm:$0xff]
        %v301 = vld [vmem:[%s289 + $0x8] sm:$0xff]
        %v302 = vld [vmem:[%s289 + $0x10] sm:$0xff]
        %v303 = vld [vmem:[%s289 + $0x18] sm:$0xff]
        %v304 = vld [vmem:[%s289 + $0x20] sm:$0xff]
        %v305 = vld [vmem:[%s289 + $0x28] sm:$0xff]
        %v306 = vld [vmem:[%s289 + $0x30] sm:$0xff]
        %v307 = vld [vmem:[%s289 + $0x38] sm:$0xff]
        %v308 = vld [vmem:[%s289 + $0x40] sm:$0xff]
        %v309 = vld [vmem:[%s289 + $0x48] sm:$0xff]
        %v310 = vld [vmem:[%s289 + $0x50] sm:$0xff]
        %v311 = vld [vmem:[%s289 + $0x58] sm:$0xff]
        %v312 = vld [vmem:[%s289 + $0x60] sm:$0xff]
        %v313 = vld [vmem:[%s289 + $0x68] sm:$0xff]
        %v314 = vld [vmem:[%s289 + $0x70] sm:$0xff]
        %v315 = vld [vmem:[%s289 + $0x78] sm:$0xff]
        %v316 = vld [vmem:[%s289 + $0x80] sm:$0xff]
        %v317 = vld [vmem:[%s289 + $0x88] sm:$0xff]
        %v318 = vld [vmem:[%s289 + $0x90] sm:$0xff]
        %v319 = vld [vmem:[%s289 + $0x98] sm:$0xff]
        %v320 = vld [vmem:[%s289 + $0xa0] sm:$0xff]
        %v321 = vld [vmem:[%s289 + $0xa8] sm:$0xff]
        %v322 = vld [vmem:[%s289 + $0xb0] sm:$0xff]
        %v323 = vld [vmem:[%s289 + $0xb8] sm:$0xff]
        %v324 = vld [vmem:[%s289 + $0xc0] sm:$0xff]
        %v325 = vld [vmem:[%s289 + $0xc8] sm:$0xff]
        %v326 = vld [vmem:[%s289 + $0xd0] sm:$0xff]
        %v327 = vld [vmem:[%s289 + $0xd8] sm:$0xff]
        %v328 = vld [vmem:[%s289 + $0xe0] sm:$0xff]
        %v329 = vld [vmem:[%s289 + $0xe8] sm:$0xff]
        %v330 = vld [vmem:[%s289 + $0xf0] sm:$0xff]
        %v331 = vld [vmem:[%s289 + $0xf8] sm:$0xff]
        %v332 = vld [vmem:[%s289 + $0x100] sm:$0xff]
        %v333 = vld [vmem:[%s289 + $0x108] sm:$0xff]
        %v334 = vld [vmem:[%s289 + $0x110] sm:$0xff]
        %v335 = vld [vmem:[%s289 + $0x118] sm:$0xff]
        %v336 = vld [vmem:[%s289 + $0x120] sm:$0xff]
        %v337 = vld [vmem:[%s289 + $0x128] sm:$0xff]
        %v338 = vld [vmem:[%s289 + $0x130] sm:$0xff]
        %v339 = vld [vmem:[%s289 + $0x138] sm:$0xff]
        %v340 = vld [vmem:[%s289 + $0x140] sm:$0xff]
        %v341 = vld [vmem:[%s289 + $0x148] sm:$0xff]
        %v342 = vld [vmem:[%s289 + $0x150] sm:$0xff]
        %v343 = vld [vmem:[%s289 + $0x158] sm:$0xff]
        %v344 = vld [vmem:[%s289 + $0x160] sm:$0xff]
        %v345 = vld [vmem:[%s289 + $0x168] sm:$0xff]
        %v346 = vld [vmem:[%s289 + $0x170] sm:$0xff]
        %v347 = vld [vmem:[%s289 + $0x178] sm:$0xff]
        %v348 = vld [vmem:[%s289 + $0x180] sm:$0xff]
        %v349 = vld [vmem:[%s289 + $0x188] sm:$0xff]
        %v350 = vld [vmem:[%s289 + $0x190] sm:$0xff]
        %v351 = vld [vmem:[%s289 + $0x198] sm:$0xff]
        %v352 = vld [vmem:[%s289 + $0x1a0] sm:$0xff]
        %v353 = vld [vmem:[%s289 + $0x1a8] sm:$0xff]
        %v354 = vld [vmem:[%s289 + $0x1b0] sm:$0xff]
        %v355 = vld [vmem:[%s289 + $0x1b8] sm:$0xff]
        %v356 = vld [vmem:[%s289 + $0x1c0] sm:$0xff]
        %v357 = vld [vmem:[%s289 + $0x1c8] sm:$0xff]
        %v358 = vld [vmem:[%s289 + $0x1d0] sm:$0xff]
        %v359 = vld [vmem:[%s289 + $0x1d8] sm:$0xff]
        %v360 = vld [vmem:[%s289 + $0x1e0] sm:$0xff]
        %v361 = vld [vmem:[%s289 + $0x1e8] sm:$0xff]
        %v362 = vld [vmem:[%s289 + $0x1f0] sm:$0xff]
        %v363 = vld [vmem:[%s289 + $0x1f8] sm:$0xff]
        %v364 = vld [vmem:[%s1] sm:$0xff]
        %v365 = vld [vmem:[%s2] sm:$0x1]
        %v367 = vlaneseq
        %v368 = vshrl.u32 %v367, 7
        %v369 = vsub.s32 0, %v368
        %v370 = vrot.slane %v365, %v369
        %vm372 = vcmask 64512
        %v374 = vsel %vm372, %v300, 0
        %v377 = vsel %vm372, %v301, 0
        %v380 = vsel %vm372, %v302, 0
        %v383 = vsel %vm372, %v303, 0
        %v386 = vsel %vm372, %v304, 0
        %v389 = vsel %vm372, %v305, 0
        %v392 = vsel %vm372, %v306, 0
        %v395 = vsel %vm372, %v307, 0
        %v398 = vsel %vm372, %v308, 0
        %v401 = vsel %vm372, %v309, 0
        %v404 = vsel %vm372, %v310, 0
        %v407 = vsel %vm372, %v311, 0
        %v410 = vsel %vm372, %v312, 0
        %v413 = vsel %vm372, %v313, 0
        %v416 = vsel %vm372, %v314, 0
        %v419 = vsel %vm372, %v315, 0
        %v422 = vsel %vm372, %v316, 0
        %v425 = vsel %vm372, %v317, 0
        %v428 = vsel %vm372, %v318, 0
        %v431 = vsel %vm372, %v319, 0
        %v434 = vsel %vm372, %v320, 0
        %v437 = vsel %vm372, %v321, 0
        %v440 = vsel %vm372, %v322, 0
        %v443 = vsel %vm372, %v323, 0
        %v446 = vsel %vm372, %v324, 0
        %v449 = vsel %vm372, %v325, 0
        %v452 = vsel %vm372, %v326, 0
        %v455 = vsel %vm372, %v327, 0
        %v458 = vsel %vm372, %v328, 0
        %v461 = vsel %vm372, %v329, 0
        %v464 = vsel %vm372, %v330, 0
        %v467 = vsel %vm372, %v331, 0
        %v470 = vsel %vm372, %v332, 0
        %v473 = vsel %vm372, %v333, 0
        %v476 = vsel %vm372, %v334, 0
        %v479 = vsel %vm372, %v335, 0
        %v482 = vsel %vm372, %v336, 0
        %v485 = vsel %vm372, %v337, 0
        %v488 = vsel %vm372, %v338, 0
        %v491 = vsel %vm372, %v339, 0
        %v494 = vsel %vm372, %v340, 0
        %v497 = vsel %vm372, %v341, 0
        %v500 = vsel %vm372, %v342, 0
        %v503 = vsel %vm372, %v343, 0
        %v506 = vsel %vm372, %v344, 0
        %v509 = vsel %vm372, %v345, 0
        %v512 = vsel %vm372, %v346, 0
        %v515 = vsel %vm372, %v347, 0
        %v518 = vsel %vm372, %v348, 0
        %v521 = vsel %vm372, %v349, 0
        %v524 = vsel %vm372, %v350, 0
        %v527 = vsel %vm372, %v351, 0
        %v530 = vsel %vm372, %v352, 0
        %v533 = vsel %vm372, %v353, 0
        %v536 = vsel %vm372, %v354, 0
        %v539 = vsel %vm372, %v355, 0
        %v542 = vsel %vm372, %v356, 0
        %v545 = vsel %vm372, %v357, 0
        %v548 = vsel %vm372, %v358, 0
        %v551 = vsel %vm372, %v359, 0
        %v554 = vsel %vm372, %v360, 0
        %v557 = vsel %vm372, %v361, 0
        %v560 = vsel %vm372, %v362, 0
        %v563 = vsel %vm372, %v363, 0
        %565 = vmatprep.subr.mxu0 0.0
        %566 = vmatpush1.msra.mxu0 %v364
        %567 = vmatprep.subr.mxu0 0.0
        %568 = vmatpush1.msra.mxu0 0.0
        %569 = vmatprep.subr.mxu0 0.0
        %570 = vmatpush1.msra.mxu0 0.0
        %571 = vmatprep.subr.mxu0 0.0
        %572 = vmatpush1.msra.mxu0 0.0
        %573 = vmatprep.subr.mxu0 0.0
        %574 = vmatpush1.msra.mxu0 0.0
        %575 = vmatprep.subr.mxu0 0.0
        %576 = vmatpush1.msra.mxu0 0.0
        %577 = vmatprep.subr.mxu0 0.0
        %578 = vmatpush1.msra.mxu0 0.0
        %579 = vmatprep.subr.mxu0 0.0
        %580 = vmatpush1.msra.mxu0 0.0
        %581 = vmatprep.subr.mxu0 0.0
        %582 = vmatpush1.msra.mxu0 0.0
        %583 = vmatprep.subr.mxu0 0.0
        %584 = vmatpush1.msra.mxu0 0.0
        %585 = vmatprep.subr.mxu0 0.0
        %586 = vmatpush1.msra.mxu0 0.0
        %587 = vmatprep.subr.mxu0 0.0
        %588 = vmatpush1.msra.mxu0 0.0
        %589 = vmatprep.subr.mxu0 0.0
        %590 = vmatpush1.msra.mxu0 0.0
        %591 = vmatprep.subr.mxu0 0.0
        %592 = vmatpush1.msra.mxu0 0.0
        %593 = vmatprep.subr.mxu0 0.0
        %594 = vmatpush1.msra.mxu0 0.0
        %595 = vmatprep.subr.mxu0 0.0
        %596 = vmatpush1.msra.mxu0 0.0
        %597 = vmatprep.subr.mxu0 0.0
        %598 = vmatpush1.msra.mxu0 0.0
        %599 = vmatprep.subr.mxu0 0.0
        %600 = vmatpush1.msra.mxu0 0.0
        %601 = vmatprep.subr.mxu0 0.0
        %602 = vmatpush1.msra.mxu0 0.0
        %603 = vmatprep.subr.mxu0 0.0
        %604 = vmatpush1.msra.mxu0 0.0
        %605 = vmatprep.subr.mxu0 0.0
        %606 = vmatpush1.msra.mxu0 0.0
        %607 = vmatprep.subr.mxu0 0.0
        %608 = vmatpush1.msra.mxu0 0.0
        %609 = vmatprep.subr.mxu0 0.0
        %610 = vmatpush1.msra.mxu0 0.0
        %611 = vmatprep.subr.mxu0 0.0
        %612 = vmatpush1.msra.mxu0 0.0
        %613 = vmatprep.subr.mxu0 0.0
        %614 = vmatpush1.msra.mxu0 0.0
        %615 = vmatprep.subr.mxu0 0.0
        %616 = vmatpush1.msra.mxu0 0.0
        %617 = vmatprep.subr.mxu0 0.0
        %618 = vmatpush1.msra.mxu0 0.0
        %619 = vmatprep.subr.mxu0 0.0
        %620 = vmatpush1.msra.mxu0 0.0
        %621 = vmatprep.subr.mxu0 0.0
        %622 = vmatpush1.msra.mxu0 0.0
        %623 = vmatprep.subr.mxu0 0.0
        %624 = vmatpush1.msra.mxu0 0.0
        %625 = vmatprep.subr.mxu0 0.0
        %626 = vmatpush1.msra.mxu0 0.0
        %627 = vmatprep.subr.mxu0 0.0
        %628 = vmatpush1.msra.mxu0 0.0
        %629 = vmatprep.mubr.f32.mxu0 0.0
        %630 = vmatmul.mubr.f32.gmra.mrb[0].mxu0 %v374
        %v631 = vpop.f32.mrb[0].mxu0
        %v632 = vadd.f32 %v370, %v631
        %v633 = vpop.f32.mrb[0].mxu0
        %634 = vmatprep.mubr.f32.mxu0 0.0
        %635 = vmatmul.mubr.f32.gmra.mrb[0].mxu0 %v377
        %v636 = vpop.f32.mrb[0].mxu0
        %v637 = vadd.f32 %v370, %v636
        %v638 = vpop.f32.mrb[0].mxu0
        %639 = vmatprep.mubr.f32.mxu0 0.0
        %640 = vmatmul.mubr.f32.gmra.mrb[0].mxu0 %v380
        %v641 = vpop.f32.mrb[0].mxu0
        %v642 = vadd.f32 %v370, %v641
        %v643 = vpop.f32.mrb[0].mxu0
        %644 = vmatprep.mubr.f32.mxu0 0.0
        %645 = vmatmul.mubr.f32.gmra.mrb[0].mxu0 %v383
        %v646 = vpop.f32.mrb[0].mxu0
        %v647 = vadd.f32 %v370, %v646
        %v648 = vpop.f32.mrb[0].mxu0
        %649 = vmatprep.mubr.f32.mxu0 0.0
        %650 = vmatmul.mubr.f32.gmra.mrb[0].mxu0 %v386
        %v651 = vpop.f32.mrb[0].mxu0
        %v652 = vadd.f32 %v370, %v651
        %v653 = vpop.f32.mrb[0].mxu0
        %654 = vmatprep.mubr.f32.mxu0 0.0
        %655 = vmatmul.mubr.f32.gmra.mrb[0].mxu0 %v389
        %v656 = vpop.f32.mrb[0].mxu0
        %v657 = vadd.f32 %v370, %v656
        %v658 = vpop.f32.mrb[0].mxu0
        %659 = vmatprep.mubr.f32.mxu0 0.0
        %660 = vmatmul.mubr.f32.gmra.mrb[0].mxu0 %v392
        %v661 = vpop.f32.mrb[0].mxu0
        %v662 = vadd.f32 %v370, %v661
        %v663 = vpop.f32.mrb[0].mxu0
        %664 = vmatprep.mubr.f32.mxu0 0.0
        %665 = vmatmul.mubr.f32.gmra.mrb[0].mxu0 %v395
        %v666 = vpop.f32.mrb[0].mxu0
        %v667 = vadd.f32 %v370, %v666
        %v668 = vpop.f32.mrb[0].mxu0
        %669 = vmatprep.mubr.f32.mxu0 0.0
        %670 = vmatmul.mubr.f32.gmra.mrb[0].mxu0 %v398
        %v671 = vpop.f32.mrb[0].mxu0
        %v672 = vadd.f32 %v370, %v671
        %v673 = vpop.f32.mrb[0].mxu0
        %674 = vmatprep.mubr.f32.mxu0 0.0
        %675 = vmatmul.mubr.f32.gmra.mrb[0].mxu0 %v401
        %v676 = vpop.f32.mrb[0].mxu0
        %v677 = vadd.f32 %v370, %v676
        %v678 = vpop.f32.mrb[0].mxu0
        %679 = vmatprep.mubr.f32.mxu0 0.0
        %680 = vmatmul.mubr.f32.gmra.mrb[0].mxu0 %v404
        %v681 = vpop.f32.mrb[0].mxu0
        %v682 = vadd.f32 %v370, %v681
        %v683 = vpop.f32.mrb[0].mxu0
        %684 = vmatprep.mubr.f32.mxu0 0.0
        %685 = vmatmul.mubr.f32.gmra.mrb[0].mxu0 %v407
        %v686 = vpop.f32.mrb[0].mxu0
        %v687 = vadd.f32 %v370, %v686
        %v688 = vpop.f32.mrb[0].mxu0
        %689 = vmatprep.mubr.f32.mxu0 0.0
        %690 = vmatmul.mubr.f32.gmra.mrb[0].mxu0 %v410
        %v691 = vpop.f32.mrb[0].mxu0
        %v692 = vadd.f32 %v370, %v691
        %v693 = vpop.f32.mrb[0].mxu0
        %694 = vmatprep.mubr.f32.mxu0 0.0
        %695 = vmatmul.mubr.f32.gmra.mrb[0].mxu0 %v413
        %v696 = vpop.f32.mrb[0].mxu0
        %v697 = vadd.f32 %v370, %v696
        %v698 = vpop.f32.mrb[0].mxu0
        %699 = vmatprep.mubr.f32.mxu0 0.0
        %700 = vmatmul.mubr.f32.gmra.mrb[0].mxu0 %v416
        %v701 = vpop.f32.mrb[0].mxu0
        %v702 = vadd.f32 %v370, %v701
        %v703 = vpop.f32.mrb[0].mxu0
        %704 = vmatprep.mubr.f32.mxu0 0.0
        %705 = vmatmul.mubr.f32.gmra.mrb[0].mxu0 %v419
        %v706 = vpop.f32.mrb[0].mxu0
        %v707 = vadd.f32 %v370, %v706
        %v708 = vpop.f32.mrb[0].mxu0
        %709 = vmatprep.mubr.f32.mxu0 0.0
        %710 = vmatmul.mubr.f32.gmra.mrb[0].mxu0 %v422
        %v711 = vpop.f32.mrb[0].mxu0
        %v712 = vadd.f32 %v370, %v711
        %v713 = vpop.f32.mrb[0].mxu0
        %714 = vmatprep.mubr.f32.mxu0 0.0
        %715 = vmatmul.mubr.f32.gmra.mrb[0].mxu0 %v425
        %v716 = vpop.f32.mrb[0].mxu0
        %v717 = vadd.f32 %v370, %v716
        %v718 = vpop.f32.mrb[0].mxu0
        %719 = vmatprep.mubr.f32.mxu0 0.0
        %720 = vmatmul.mubr.f32.gmra.mrb[0].mxu0 %v428
        %v721 = vpop.f32.mrb[0].mxu0
        %v722 = vadd.f32 %v370, %v721
        %v723 = vpop.f32.mrb[0].mxu0
        %724 = vmatprep.mubr.f32.mxu0 0.0
        %725 = vmatmul.mubr.f32.gmra.mrb[0].mxu0 %v431
        %v726 = vpop.f32.mrb[0].mxu0
        %v727 = vadd.f32 %v370, %v726
        %v728 = vpop.f32.mrb[0].mxu0
        %729 = vmatprep.mubr.f32.mxu0 0.0
        %730 = vmatmul.mubr.f32.gmra.mrb[0].mxu0 %v434
        %v731 = vpop.f32.mrb[0].mxu0
        %v732 = vadd.f32 %v370, %v731
        %v733 = vpop.f32.mrb[0].mxu0
        %734 = vmatprep.mubr.f32.mxu0 0.0
        %735 = vmatmul.mubr.f32.gmra.mrb[0].mxu0 %v437
        %v736 = vpop.f32.mrb[0].mxu0
        %v737 = vadd.f32 %v370, %v736
        %v738 = vpop.f32.mrb[0].mxu0
        %739 = vmatprep.mubr.f32.mxu0 0.0
        %740 = vmatmul.mubr.f32.gmra.mrb[0].mxu0 %v440
        %v741 = vpop.f32.mrb[0].mxu0
        %v742 = vadd.f32 %v370, %v741
        %v743 = vpop.f32.mrb[0].mxu0
        %744 = vmatprep.mubr.f32.mxu0 0.0
        %745 = vmatmul.mubr.f32.gmra.mrb[0].mxu0 %v443
        %v746 = vpop.f32.mrb[0].mxu0
        %v747 = vadd.f32 %v370, %v746
        %v748 = vpop.f32.mrb[0].mxu0
        %749 = vmatprep.mubr.f32.mxu0 0.0
        %750 = vmatmul.mubr.f32.gmra.mrb[0].mxu0 %v446
        %v751 = vpop.f32.mrb[0].mxu0
        %v752 = vadd.f32 %v370, %v751
        %v753 = vpop.f32.mrb[0].mxu0
        %754 = vmatprep.mubr.f32.mxu0 0.0
        %755 = vmatmul.mubr.f32.gmra.mrb[0].mxu0 %v449
        %v756 = vpop.f32.mrb[0].mxu0
        %v757 = vadd.f32 %v370, %v756
        %v758 = vpop.f32.mrb[0].mxu0
        %759 = vmatprep.mubr.f32.mxu0 0.0
        %760 = vmatmul.mubr.f32.gmra.mrb[0].mxu0 %v452
        %v761 = vpop.f32.mrb[0].mxu0
        %v762 = vadd.f32 %v370, %v761
        %v763 = vpop.f32.mrb[0].mxu0
        %764 = vmatprep.mubr.f32.mxu0 0.0
        %765 = vmatmul.mubr.f32.gmra.mrb[0].mxu0 %v455
        %v766 = vpop.f32.mrb[0].mxu0
        %v767 = vadd.f32 %v370, %v766
        %v768 = vpop.f32.mrb[0].mxu0
        %769 = vmatprep.mubr.f32.mxu0 0.0
        %770 = vmatmul.mubr.f32.gmra.mrb[0].mxu0 %v458
        %v771 = vpop.f32.mrb[0].mxu0
        %v772 = vadd.f32 %v370, %v771
        %v773 = vpop.f32.mrb[0].mxu0
        %774 = vmatprep.mubr.f32.mxu0 0.0
        %775 = vmatmul.mubr.f32.gmra.mrb[0].mxu0 %v461
        %v776 = vpop.f32.mrb[0].mxu0
        %v777 = vadd.f32 %v370, %v776
        %v778 = vpop.f32.mrb[0].mxu0
        %779 = vmatprep.mubr.f32.mxu0 0.0
        %780 = vmatmul.mubr.f32.gmra.mrb[0].mxu0 %v464
        %v781 = vpop.f32.mrb[0].mxu0
        %v782 = vadd.f32 %v370, %v781
        %v783 = vpop.f32.mrb[0].mxu0
        %784 = vmatprep.mubr.f32.mxu0 0.0
        %785 = vmatmul.mubr.f32.gmra.mrb[0].mxu0 %v467
        %v786 = vpop.f32.mrb[0].mxu0
        %v787 = vadd.f32 %v370, %v786
        %v788 = vpop.f32.mrb[0].mxu0
        %789 = vmatprep.mubr.f32.mxu0 0.0
        %790 = vmatmul.mubr.f32.gmra.mrb[0].mxu0 %v470
        %v791 = vpop.f32.mrb[0].mxu0
        %v792 = vadd.f32 %v370, %v791
        %v793 = vpop.f32.mrb[0].mxu0
        %794 = vmatprep.mubr.f32.mxu0 0.0
        %795 = vmatmul.mubr.f32.gmra.mrb[0].mxu0 %v473
        %v796 = vpop.f32.mrb[0].mxu0
        %v797 = vadd.f32 %v370, %v796
        %v798 = vpop.f32.mrb[0].mxu0
        %799 = vmatprep.mubr.f32.mxu0 0.0
        %800 = vmatmul.mubr.f32.gmra.mrb[0].mxu0 %v476
        %v801 = vpop.f32.mrb[0].mxu0
        %v802 = vadd.f32 %v370, %v801
        %v803 = vpop.f32.mrb[0].mxu0
        %804 = vmatprep.mubr.f32.mxu0 0.0
        %805 = vmatmul.mubr.f32.gmra.mrb[0].mxu0 %v479
        %v806 = vpop.f32.mrb[0].mxu0
        %v807 = vadd.f32 %v370, %v806
        %v808 = vpop.f32.mrb[0].mxu0
        %809 = vmatprep.mubr.f32.mxu0 0.0
        %810 = vmatmul.mubr.f32.gmra.mrb[0].mxu0 %v482
        %v811 = vpop.f32.mrb[0].mxu0
        %v812 = vadd.f32 %v370, %v811
        %v813 = vpop.f32.mrb[0].mxu0
        %814 = vmatprep.mubr.f32.mxu0 0.0
        %815 = vmatmul.mubr.f32.gmra.mrb[0].mxu0 %v485
        %v816 = vpop.f32.mrb[0].mxu0
        %v817 = vadd.f32 %v370, %v816
        %v818 = vpop.f32.mrb[0].mxu0
        %819 = vmatprep.mubr.f32.mxu0 0.0
        %820 = vmatmul.mubr.f32.gmra.mrb[0].mxu0 %v488
        %v821 = vpop.f32.mrb[0].mxu0
        %v822 = vadd.f32 %v370, %v821
        %v823 = vpop.f32.mrb[0].mxu0
        %824 = vmatprep.mubr.f32.mxu0 0.0
        %825 = vmatmul.mubr.f32.gmra.mrb[0].mxu0 %v491
        %v826 = vpop.f32.mrb[0].mxu0
        %v827 = vadd.f32 %v370, %v826
        %v828 = vpop.f32.mrb[0].mxu0
        %829 = vmatprep.mubr.f32.mxu0 0.0
        %830 = vmatmul.mubr.f32.gmra.mrb[0].mxu0 %v494
        %v831 = vpop.f32.mrb[0].mxu0
        %v832 = vadd.f32 %v370, %v831
        %v833 = vpop.f32.mrb[0].mxu0
        %834 = vmatprep.mubr.f32.mxu0 0.0
        %835 = vmatmul.mubr.f32.gmra.mrb[0].mxu0 %v497
        %v836 = vpop.f32.mrb[0].mxu0
        %v837 = vadd.f32 %v370, %v836
        %v838 = vpop.f32.mrb[0].mxu0
        %839 = vmatprep.mubr.f32.mxu0 0.0
        %840 = vmatmul.mubr.f32.gmra.mrb[0].mxu0 %v500
        %v841 = vpop.f32.mrb[0].mxu0
        %v842 = vadd.f32 %v370, %v841
        %v843 = vpop.f32.mrb[0].mxu0
        %844 = vmatprep.mubr.f32.mxu0 0.0
        %845 = vmatmul.mubr.f32.gmra.mrb[0].mxu0 %v503
        %v846 = vpop.f32.mrb[0].mxu0
        %v847 = vadd.f32 %v370, %v846
        %v848 = vpop.f32.mrb[0].mxu0
        %849 = vmatprep.mubr.f32.mxu0 0.0
        %850 = vmatmul.mubr.f32.gmra.mrb[0].mxu0 %v506
        %v851 = vpop.f32.mrb[0].mxu0
        %v852 = vadd.f32 %v370, %v851
        %v853 = vpop.f32.mrb[0].mxu0
        %854 = vmatprep.mubr.f32.mxu0 0.0
        %855 = vmatmul.mubr.f32.gmra.mrb[0].mxu0 %v509
        %v856 = vpop.f32.mrb[0].mxu0
        %v857 = vadd.f32 %v370, %v856
        %v858 = vpop.f32.mrb[0].mxu0
        %859 = vmatprep.mubr.f32.mxu0 0.0
        %860 = vmatmul.mubr.f32.gmra.mrb[0].mxu0 %v512
        %v861 = vpop.f32.mrb[0].mxu0
        %v862 = vadd.f32 %v370, %v861
        %v863 = vpop.f32.mrb[0].mxu0
        %864 = vmatprep.mubr.f32.mxu0 0.0
        %865 = vmatmul.mubr.f32.gmra.mrb[0].mxu0 %v515
        %v866 = vpop.f32.mrb[0].mxu0
        %v867 = vadd.f32 %v370, %v866
        %v868 = vpop.f32.mrb[0].mxu0
        %869 = vmatprep.mubr.f32.mxu0 0.0
        %870 = vmatmul.mubr.f32.gmra.mrb[0].mxu0 %v518
        %v871 = vpop.f32.mrb[0].mxu0
        %v872 = vadd.f32 %v370, %v871
        %v873 = vpop.f32.mrb[0].mxu0
        %874 = vmatprep.mubr.f32.mxu0 0.0
        %875 = vmatmul.mubr.f32.gmra.mrb[0].mxu0 %v521
        %v876 = vpop.f32.mrb[0].mxu0
        %v877 = vadd.f32 %v370, %v876
        %v878 = vpop.f32.mrb[0].mxu0
        %879 = vmatprep.mubr.f32.mxu0 0.0
        %880 = vmatmul.mubr.f32.gmra.mrb[0].mxu0 %v524
        %v881 = vpop.f32.mrb[0].mxu0
        %v882 = vadd.f32 %v370, %v881
        %v883 = vpop.f32.mrb[0].mxu0
        %884 = vmatprep.mubr.f32.mxu0 0.0
        %885 = vmatmul.mubr.f32.gmra.mrb[0].mxu0 %v527
        %v886 = vpop.f32.mrb[0].mxu0
        %v887 = vadd.f32 %v370, %v886
        %v888 = vpop.f32.mrb[0].mxu0
        %889 = vmatprep.mubr.f32.mxu0 0.0
        %890 = vmatmul.mubr.f32.gmra.mrb[0].mxu0 %v530
        %v891 = vpop.f32.mrb[0].mxu0
        %v892 = vadd.f32 %v370, %v891
        %v893 = vpop.f32.mrb[0].mxu0
        %894 = vmatprep.mubr.f32.mxu0 0.0
        %895 = vmatmul.mubr.f32.gmra.mrb[0].mxu0 %v533
        %v896 = vpop.f32.mrb[0].mxu0
        %v897 = vadd.f32 %v370, %v896
        %v898 = vpop.f32.mrb[0].mxu0
        %899 = vmatprep.mubr.f32.mxu0 0.0
        %900 = vmatmul.mubr.f32.gmra.mrb[0].mxu0 %v536
        %v901 = vpop.f32.mrb[0].mxu0
        %v902 = vadd.f32 %v370, %v901
        %v903 = vpop.f32.mrb[0].mxu0
        %904 = vmatprep.mubr.f32.mxu0 0.0
        %905 = vmatmul.mubr.f32.gmra.mrb[0].mxu0 %v539
        %v906 = vpop.f32.mrb[0].mxu0
        %v907 = vadd.f32 %v370, %v906
        %v908 = vpop.f32.mrb[0].mxu0
        %909 = vmatprep.mubr.f32.mxu0 0.0
        %910 = vmatmul.mubr.f32.gmra.mrb[0].mxu0 %v542
        %v911 = vpop.f32.mrb[0].mxu0
        %v912 = vadd.f32 %v370, %v911
        %v913 = vpop.f32.mrb[0].mxu0
        %914 = vmatprep.mubr.f32.mxu0 0.0
        %915 = vmatmul.mubr.f32.gmra.mrb[0].mxu0 %v545
        %v916 = vpop.f32.mrb[0].mxu0
        %v917 = vadd.f32 %v370, %v916
        %v918 = vpop.f32.mrb[0].mxu0
        %919 = vmatprep.mubr.f32.mxu0 0.0
        %920 = vmatmul.mubr.f32.gmra.mrb[0].mxu0 %v548
        %v921 = vpop.f32.mrb[0].mxu0
        %v922 = vadd.f32 %v370, %v921
        %v923 = vpop.f32.mrb[0].mxu0
        %924 = vmatprep.mubr.f32.mxu0 0.0
        %925 = vmatmul.mubr.f32.gmra.mrb[0].mxu0 %v551
        %v926 = vpop.f32.mrb[0].mxu0
        %v927 = vadd.f32 %v370, %v926
        %v928 = vpop.f32.mrb[0].mxu0
        %929 = vmatprep.mubr.f32.mxu0 0.0
        %930 = vmatmul.mubr.f32.gmra.mrb[0].mxu0 %v554
        %v931 = vpop.f32.mrb[0].mxu0
        %v932 = vadd.f32 %v370, %v931
        %v933 = vpop.f32.mrb[0].mxu0
        %934 = vmatprep.mubr.f32.mxu0 0.0
        %935 = vmatmul.mubr.f32.gmra.mrb[0].mxu0 %v557
        %v936 = vpop.f32.mrb[0].mxu0
        %v937 = vadd.f32 %v370, %v936
        %v938 = vpop.f32.mrb[0].mxu0
        %939 = vmatprep.mubr.f32.mxu0 0.0
        %940 = vmatmul.mubr.f32.gmra.mrb[0].mxu0 %v560
        %v941 = vpop.f32.mrb[0].mxu0
        %v942 = vadd.f32 %v370, %v941
        %v943 = vpop.f32.mrb[0].mxu0
        %944 = vmatprep.mubr.f32.mxu0 0.0
        %945 = vmatmul.mubr.f32.gmra.mrb[0].mxu0 %v563
        %v946 = vpop.f32.mrb[0].mxu0
        %v947 = vadd.f32 %v370, %v946
        %v948 = vpop.f32.mrb[0].mxu0
        %949 = vdwg.mxu0
        %vm950 = vcmp.gt.f32.partialorder %v632, 0.0
        %vm951 = vcmp.gt.f32.partialorder %v637, 0.0
        %vm952 = vcmp.gt.f32.partialorder %v642, 0.0
        %vm953 = vcmp.gt.f32.partialorder %v647, 0.0
        %vm954 = vcmp.gt.f32.partialorder %v652, 0.0
        %vm955 = vcmp.gt.f32.partialorder %v657, 0.0
        %vm956 = vcmp.gt.f32.partialorder %v662, 0.0
        %vm957 = vcmp.gt.f32.partialorder %v667, 0.0
        %vm958 = vcmp.gt.f32.partialorder %v672, 0.0
        %vm959 = vcmp.gt.f32.partialorder %v677, 0.0
        %vm960 = vcmp.gt.f32.partialorder %v682, 0.0
        %vm961 = vcmp.gt.f32.partialorder %v687, 0.0
        %vm962 = vcmp.gt.f32.partialorder %v692, 0.0
        %vm963 = vcmp.gt.f32.partialorder %v697, 0.0
        %vm964 = vcmp.gt.f32.partialorder %v702, 0.0
        %vm965 = vcmp.gt.f32.partialorder %v707, 0.0
        %vm966 = vcmp.gt.f32.partialorder %v712, 0.0
        %vm967 = vcmp.gt.f32.partialorder %v717, 0.0
        %vm968 = vcmp.gt.f32.partialorder %v722, 0.0
        %vm969 = vcmp.gt.f32.partialorder %v727, 0.0
        %vm970 = vcmp.gt.f32.partialorder %v732, 0.0
        %vm971 = vcmp.gt.f32.partialorder %v737, 0.0
        %vm972 = vcmp.gt.f32.partialorder %v742, 0.0
        %vm973 = vcmp.gt.f32.partialorder %v747, 0.0
        %vm974 = vcmp.gt.f32.partialorder %v752, 0.0
        %vm975 = vcmp.gt.f32.partialorder %v757, 0.0
        %vm976 = vcmp.gt.f32.partialorder %v762, 0.0
        %vm977 = vcmp.gt.f32.partialorder %v767, 0.0
        %vm978 = vcmp.gt.f32.partialorder %v772, 0.0
        %vm979 = vcmp.gt.f32.partialorder %v777, 0.0
        %vm980 = vcmp.gt.f32.partialorder %v782, 0.0
        %vm981 = vcmp.gt.f32.partialorder %v787, 0.0
        %vm982 = vcmp.gt.f32.partialorder %v792, 0.0
        %vm983 = vcmp.gt.f32.partialorder %v797, 0.0
        %vm984 = vcmp.gt.f32.partialorder %v802, 0.0
        %vm985 = vcmp.gt.f32.partialorder %v807, 0.0
        %vm986 = vcmp.gt.f32.partialorder %v812, 0.0
        %vm987 = vcmp.gt.f32.partialorder %v817, 0.0
        %vm988 = vcmp.gt.f32.partialorder %v822, 0.0
        %vm989 = vcmp.gt.f32.partialorder %v827, 0.0
        %vm990 = vcmp.gt.f32.partialorder %v832, 0.0
        %vm991 = vcmp.gt.f32.partialorder %v837, 0.0
        %vm992 = vcmp.gt.f32.partialorder %v842, 0.0
        %vm993 = vcmp.gt.f32.partialorder %v847, 0.0
        %vm994 = vcmp.gt.f32.partialorder %v852, 0.0
        %vm995 = vcmp.gt.f32.partialorder %v857, 0.0
        %vm996 = vcmp.gt.f32.partialorder %v862, 0.0
        %vm997 = vcmp.gt.f32.partialorder %v867, 0.0
        %vm998 = vcmp.gt.f32.partialorder %v872, 0.0
        %vm999 = vcmp.gt.f32.partialorder %v877, 0.0
        %vm1000 = vcmp.gt.f32.partialorder %v882, 0.0
        %vm1001 = vcmp.gt.f32.partialorder %v887, 0.0
        %vm1002 = vcmp.gt.f32.partialorder %v892, 0.0
        %vm1003 = vcmp.gt.f32.partialorder %v897, 0.0
        %vm1004 = vcmp.gt.f32.partialorder %v902, 0.0
        %vm1005 = vcmp.gt.f32.partialorder %v907, 0.0
        %vm1006 = vcmp.gt.f32.partialorder %v912, 0.0
        %vm1007 = vcmp.gt.f32.partialorder %v917, 0.0
        %vm1008 = vcmp.gt.f32.partialorder %v922, 0.0
        %vm1009 = vcmp.gt.f32.partialorder %v927, 0.0
        %vm1010 = vcmp.gt.f32.partialorder %v932, 0.0
        %vm1011 = vcmp.gt.f32.partialorder %v937, 0.0
        %vm1012 = vcmp.gt.f32.partialorder %v942, 0.0
        %vm1013 = vcmp.gt.f32.partialorder %v947, 0.0
        %v1014 = vmul.f32 %v632, 0.01
        %v1015 = vmul.f32 %v637, 0.01
        %v1016 = vmul.f32 %v642, 0.01
        %v1017 = vmul.f32 %v647, 0.01
        %v1018 = vmul.f32 %v652, 0.01
        %v1019 = vmul.f32 %v657, 0.01
        %v1020 = vmul.f32 %v662, 0.01
        %v1021 = vmul.f32 %v667, 0.01
        %v1022 = vmul.f32 %v672, 0.01
        %v1023 = vmul.f32 %v677, 0.01
        %v1024 = vmul.f32 %v682, 0.01
        %v1025 = vmul.f32 %v687, 0.01
        %v1026 = vmul.f32 %v692, 0.01
        %v1027 = vmul.f32 %v697, 0.01
        %v1028 = vmul.f32 %v702, 0.01
        %v1029 = vmul.f32 %v707, 0.01
        %v1030 = vmul.f32 %v712, 0.01
        %v1031 = vmul.f32 %v717, 0.01
        %v1032 = vmul.f32 %v722, 0.01
        %v1033 = vmul.f32 %v727, 0.01
        %v1034 = vmul.f32 %v732, 0.01
        %v1035 = vmul.f32 %v737, 0.01
        %v1036 = vmul.f32 %v742, 0.01
        %v1037 = vmul.f32 %v747, 0.01
        %v1038 = vmul.f32 %v752, 0.01
        %v1039 = vmul.f32 %v757, 0.01
        %v1040 = vmul.f32 %v762, 0.01
        %v1041 = vmul.f32 %v767, 0.01
        %v1042 = vmul.f32 %v772, 0.01
        %v1043 = vmul.f32 %v777, 0.01
        %v1044 = vmul.f32 %v782, 0.01
        %v1045 = vmul.f32 %v787, 0.01
        %v1046 = vmul.f32 %v792, 0.01
        %v1047 = vmul.f32 %v797, 0.01
        %v1048 = vmul.f32 %v802, 0.01
        %v1049 = vmul.f32 %v807, 0.01
        %v1050 = vmul.f32 %v812, 0.01
        %v1051 = vmul.f32 %v817, 0.01
        %v1052 = vmul.f32 %v822, 0.01
        %v1053 = vmul.f32 %v827, 0.01
        %v1054 = vmul.f32 %v832, 0.01
        %v1055 = vmul.f32 %v837, 0.01
        %v1056 = vmul.f32 %v842, 0.01
        %v1057 = vmul.f32 %v847, 0.01
        %v1058 = vmul.f32 %v852, 0.01
        %v1059 = vmul.f32 %v857, 0.01
        %v1060 = vmul.f32 %v862, 0.01
        %v1061 = vmul.f32 %v867, 0.01
        %v1062 = vmul.f32 %v872, 0.01
        %v1063 = vmul.f32 %v877, 0.01
        %v1064 = vmul.f32 %v882, 0.01
        %v1065 = vmul.f32 %v887, 0.01
        %v1066 = vmul.f32 %v892, 0.01
        %v1067 = vmul.f32 %v897, 0.01
        %v1068 = vmul.f32 %v902, 0.01
        %v1069 = vmul.f32 %v907, 0.01
        %v1070 = vmul.f32 %v912, 0.01
        %v1071 = vmul.f32 %v917, 0.01
        %v1072 = vmul.f32 %v922, 0.01
        %v1073 = vmul.f32 %v927, 0.01
        %v1074 = vmul.f32 %v932, 0.01
        %v1075 = vmul.f32 %v937, 0.01
        %v1076 = vmul.f32 %v942, 0.01
        %v1077 = vmul.f32 %v947, 0.01
        %v1078 = vsel %vm950, %v632, %v1014
        %v1079 = vsel %vm951, %v637, %v1015
        %v1080 = vsel %vm952, %v642, %v1016
        %v1081 = vsel %vm953, %v647, %v1017
        %v1082 = vsel %vm954, %v652, %v1018
        %v1083 = vsel %vm955, %v657, %v1019
        %v1084 = vsel %vm956, %v662, %v1020
        %v1085 = vsel %vm957, %v667, %v1021
        %v1086 = vsel %vm958, %v672, %v1022
        %v1087 = vsel %vm959, %v677, %v1023
        %v1088 = vsel %vm960, %v682, %v1024
        %v1089 = vsel %vm961, %v687, %v1025
        %v1090 = vsel %vm962, %v692, %v1026
        %v1091 = vsel %vm963, %v697, %v1027
        %v1092 = vsel %vm964, %v702, %v1028
        %v1093 = vsel %vm965, %v707, %v1029
        %v1094 = vsel %vm966, %v712, %v1030
        %v1095 = vsel %vm967, %v717, %v1031
        %v1096 = vsel %vm968, %v722, %v1032
        %v1097 = vsel %vm969, %v727, %v1033
        %v1098 = vsel %vm970, %v732, %v1034
        %v1099 = vsel %vm971, %v737, %v1035
        %v1100 = vsel %vm972, %v742, %v1036
        %v1101 = vsel %vm973, %v747, %v1037
        %v1102 = vsel %vm974, %v752, %v1038
        %v1103 = vsel %vm975, %v757, %v1039
        %v1104 = vsel %vm976, %v762, %v1040
        %v1105 = vsel %vm977, %v767, %v1041
        %v1106 = vsel %vm978, %v772, %v1042
        %v1107 = vsel %vm979, %v777, %v1043
        %v1108 = vsel %vm980, %v782, %v1044
        %v1109 = vsel %vm981, %v787, %v1045
        %v1110 = vsel %vm982, %v792, %v1046
        %v1111 = vsel %vm983, %v797, %v1047
        %v1112 = vsel %vm984, %v802, %v1048
        %v1113 = vsel %vm985, %v807, %v1049
        %v1114 = vsel %vm986, %v812, %v1050
        %v1115 = vsel %vm987, %v817, %v1051
        %v1116 = vsel %vm988, %v822, %v1052
        %v1117 = vsel %vm989, %v827, %v1053
        %v1118 = vsel %vm990, %v832, %v1054
        %v1119 = vsel %vm991, %v837, %v1055
        %v1120 = vsel %vm992, %v842, %v1056
        %v1121 = vsel %vm993, %v847, %v1057
        %v1122 = vsel %vm994, %v852, %v1058
        %v1123 = vsel %vm995, %v857, %v1059
        %v1124 = vsel %vm996, %v862, %v1060
        %v1125 = vsel %vm997, %v867, %v1061
        %v1126 = vsel %vm998, %v872, %v1062
        %v1127 = vsel %vm999, %v877, %v1063
        %v1128 = vsel %vm1000, %v882, %v1064
        %v1129 = vsel %vm1001, %v887, %v1065
        %v1130 = vsel %vm1002, %v892, %v1066
        %v1131 = vsel %vm1003, %v897, %v1067
        %v1132 = vsel %vm1004, %v902, %v1068
        %v1133 = vsel %vm1005, %v907, %v1069
        %v1134 = vsel %vm1006, %v912, %v1070
        %v1135 = vsel %vm1007, %v917, %v1071
        %v1136 = vsel %vm1008, %v922, %v1072
        %v1137 = vsel %vm1009, %v927, %v1073
        %v1138 = vsel %vm1010, %v932, %v1074
        %v1139 = vsel %vm1011, %v937, %v1075
        %v1140 = vsel %vm1012, %v942, %v1076
        %v1141 = vsel %vm1013, %v947, %v1077
        %v1142 = vld [vmem:[%s3] sm:$0xff]
        %v1143 = vld [vmem:[%s3 + $0x8] sm:$0xff]
        %v1144 = vld [vmem:[%s3 + $0x10] sm:$0xff]
        %v1145 = vld [vmem:[%s3 + $0x18] sm:$0xff]
        %v1146 = vld [vmem:[%s4] sm:$0x1]
        %v1148 = vlaneseq
        %v1149 = vshrl.u32 %v1148, 7
        %v1150 = vsub.s32 0, %v1149
        %v1151 = vrot.slane %v1146, %v1150
        %vm1153 = vcmask 261120
        %v1155 = vsel %vm1153, %v1078, 0
        %v1158 = vsel %vm1153, %v1079, 0
        %v1161 = vsel %vm1153, %v1080, 0
        %v1164 = vsel %vm1153, %v1081, 0
        %v1167 = vsel %vm1153, %v1082, 0
        %v1170 = vsel %vm1153, %v1083, 0
        %v1173 = vsel %vm1153, %v1084, 0
        %v1176 = vsel %vm1153, %v1085, 0
        %v1179 = vsel %vm1153, %v1086, 0
        %v1182 = vsel %vm1153, %v1087, 0
        %v1185 = vsel %vm1153, %v1088, 0
        %v1188 = vsel %vm1153, %v1089, 0
        %v1191 = vsel %vm1153, %v1090, 0
        %v1194 = vsel %vm1153, %v1091, 0
        %v1197 = vsel %vm1153, %v1092, 0
        %v1200 = vsel %vm1153, %v1093, 0
        %v1203 = vsel %vm1153, %v1094, 0
        %v1206 = vsel %vm1153, %v1095, 0
        %v1209 = vsel %vm1153, %v1096, 0
        %v1212 = vsel %vm1153, %v1097, 0
        %v1215 = vsel %vm1153, %v1098, 0
        %v1218 = vsel %vm1153, %v1099, 0
        %v1221 = vsel %vm1153, %v1100, 0
        %v1224 = vsel %vm1153, %v1101, 0
        %v1227 = vsel %vm1153, %v1102, 0
        %v1230 = vsel %vm1153, %v1103, 0
        %v1233 = vsel %vm1153, %v1104, 0
        %v1236 = vsel %vm1153, %v1105, 0
        %v1239 = vsel %vm1153, %v1106, 0
        %v1242 = vsel %vm1153, %v1107, 0
        %v1245 = vsel %vm1153, %v1108, 0
        %v1248 = vsel %vm1153, %v1109, 0
        %v1251 = vsel %vm1153, %v1110, 0
        %v1254 = vsel %vm1153, %v1111, 0
        %v1257 = vsel %vm1153, %v1112, 0
        %v1260 = vsel %vm1153, %v1113, 0
        %v1263 = vsel %vm1153, %v1114, 0
        %v1266 = vsel %vm1153, %v1115, 0
        %v1269 = vsel %vm1153, %v1116, 0
        %v1272 = vsel %vm1153, %v1117, 0
        %v1275 = vsel %vm1153, %v1118, 0
        %v1278 = vsel %vm1153, %v1119, 0
        %v1281 = vsel %vm1153, %v1120, 0
        %v1284 = vsel %vm1153, %v1121, 0
        %v1287 = vsel %vm1153, %v1122, 0
        %v1290 = vsel %vm1153, %v1123, 0
        %v1293 = vsel %vm1153, %v1124, 0
        %v1296 = vsel %vm1153, %v1125, 0
        %v1299 = vsel %vm1153, %v1126, 0
        %v1302 = vsel %vm1153, %v1127, 0
        %v1305 = vsel %vm1153, %v1128, 0
        %v1308 = vsel %vm1153, %v1129, 0
        %v1311 = vsel %vm1153, %v1130, 0
        %v1314 = vsel %vm1153, %v1131, 0
        %v1317 = vsel %vm1153, %v1132, 0
        %v1320 = vsel %vm1153, %v1133, 0
        %v1323 = vsel %vm1153, %v1134, 0
        %v1326 = vsel %vm1153, %v1135, 0
        %v1329 = vsel %vm1153, %v1136, 0
        %v1332 = vsel %vm1153, %v1137, 0
        %v1335 = vsel %vm1153, %v1138, 0
        %v1338 = vsel %vm1153, %v1139, 0
        %v1341 = vsel %vm1153, %v1140, 0
        %v1344 = vsel %vm1153, %v1141, 0
        %1346 = vmatprep.subr.mxu0 0.0
        %1347 = vmatpush1.msra.mxu0 %v1142
        %1348 = vmatprep.subr.mxu0 0.0
        %1349 = vmatpush1.msra.mxu0 %v1143
        %1350 = vmatprep.subr.mxu0 0.0
        %1351 = vmatpush1.msra.mxu0 %v1144
        %1352 = vmatprep.subr.mxu0 0.0
        %1353 = vmatpush1.msra.mxu0 %v1145
        %1354 = vmatprep.subr.mxu0 0.0
        %1355 = vmatpush1.msra.mxu0 0.0
        %1356 = vmatprep.subr.mxu0 0.0
        %1357 = vmatpush1.msra.mxu0 0.0
        %1358 = vmatprep.subr.mxu0 0.0
        %1359 = vmatpush1.msra.mxu0 0.0
        %1360 = vmatprep.subr.mxu0 0.0
        %1361 = vmatpush1.msra.mxu0 0.0
        %1362 = vmatprep.subr.mxu0 0.0
        %1363 = vmatpush1.msra.mxu0 0.0
        %1364 = vmatprep.subr.mxu0 0.0
        %1365 = vmatpush1.msra.mxu0 0.0
        %1366 = vmatprep.subr.mxu0 0.0
        %1367 = vmatpush1.msra.mxu0 0.0
        %1368 = vmatprep.subr.mxu0 0.0
        %1369 = vmatpush1.msra.mxu0 0.0
        %1370 = vmatprep.subr.mxu0 0.0
        %1371 = vmatpush1.msra.mxu0 0.0
        %1372 = vmatprep.subr.mxu0 0.0
        %1373 = vmatpush1.msra.mxu0 0.0
        %1374 = vmatprep.subr.mxu0 0.0
        %1375 = vmatpush1.msra.mxu0 0.0
        %1376 = vmatprep.subr.mxu0 0.0
        %1377 = vmatpush1.msra.mxu0 0.0
        %1378 = vmatprep.subr.mxu0 0.0
        %1379 = vmatpush1.msra.mxu0 0.0
        %1380 = vmatprep.subr.mxu0 0.0
        %1381 = vmatpush1.msra.mxu0 0.0
        %1382 = vmatprep.subr.mxu0 0.0
        %1383 = vmatpush1.msra.mxu0 0.0
        %1384 = vmatprep.subr.mxu0 0.0
        %1385 = vmatpush1.msra.mxu0 0.0
        %1386 = vmatprep.subr.mxu0 0.0
        %1387 = vmatpush1.msra.mxu0 0.0
        %1388 = vmatprep.subr.mxu0 0.0
        %1389 = vmatpush1.msra.mxu0 0.0
        %1390 = vmatprep.subr.mxu0 0.0
        %1391 = vmatpush1.msra.mxu0 0.0
        %1392 = vmatprep.subr.mxu0 0.0
        %1393 = vmatpush1.msra.mxu0 0.0
        %1394 = vmatprep.subr.mxu0 0.0
        %1395 = vmatpush1.msra.mxu0 0.0
        %1396 = vmatprep.subr.mxu0 0.0
        %1397 = vmatpush1.msra.mxu0 0.0
        %1398 = vmatprep.subr.mxu0 0.0
        %1399 = vmatpush1.msra.mxu0 0.0
        %1400 = vmatprep.subr.mxu0 0.0
        %1401 = vmatpush1.msra.mxu0 0.0
        %1402 = vmatprep.subr.mxu0 0.0
        %1403 = vmatpush1.msra.mxu0 0.0
        %1404 = vmatprep.subr.mxu0 0.0
        %1405 = vmatpush1.msra.mxu0 0.0
        %1406 = vmatprep.subr.mxu0 0.0
        %1407 = vmatpush1.msra.mxu0 0.0
        %1408 = vmatprep.subr.mxu0 0.0
        %1409 = vmatpush1.msra.mxu0 0.0
        %1410 = vmatprep.mubr.f32.mxu0 0.0
        %1411 = vmatmul.mubr.f32.gmra.mrb[0].mxu0 %v1155
        %v1412 = vpop.f32.mrb[0].mxu0
        %v1413 = vadd.f32 %v1151, %v1412
        %v1414 = vpop.f32.mrb[0].mxu0
        %1415 = vmatprep.mubr.f32.mxu0 0.0
        %1416 = vmatmul.mubr.f32.gmra.mrb[0].mxu0 %v1158
        %v1417 = vpop.f32.mrb[0].mxu0
        %v1418 = vadd.f32 %v1151, %v1417
        %v1419 = vpop.f32.mrb[0].mxu0
        %1420 = vmatprep.mubr.f32.mxu0 0.0
        %1421 = vmatmul.mubr.f32.gmra.mrb[0].mxu0 %v1161
        %v1422 = vpop.f32.mrb[0].mxu0
        %v1423 = vadd.f32 %v1151, %v1422
        %v1424 = vpop.f32.mrb[0].mxu0
        %1425 = vmatprep.mubr.f32.mxu0 0.0
        %1426 = vmatmul.mubr.f32.gmra.mrb[0].mxu0 %v1164
        %v1427 = vpop.f32.mrb[0].mxu0
        %v1428 = vadd.f32 %v1151, %v1427
        %v1429 = vpop.f32.mrb[0].mxu0
        %1430 = vmatprep.mubr.f32.mxu0 0.0
        %1431 = vmatmul.mubr.f32.gmra.mrb[0].mxu0 %v1167
        %v1432 = vpop.f32.mrb[0].mxu0
        %v1433 = vadd.f32 %v1151, %v1432
        %v1434 = vpop.f32.mrb[0].mxu0
        %1435 = vmatprep.mubr.f32.mxu0 0.0
        %1436 = vmatmul.mubr.f32.gmra.mrb[0].mxu0 %v1170
        %v1437 = vpop.f32.mrb[0].mxu0
        %v1438 = vadd.f32 %v1151, %v1437
        %v1439 = vpop.f32.mrb[0].mxu0
        %1440 = vmatprep.mubr.f32.mxu0 0.0
        %1441 = vmatmul.mubr.f32.gmra.mrb[0].mxu0 %v1173
        %v1442 = vpop.f32.mrb[0].mxu0
        %v1443 = vadd.f32 %v1151, %v1442
        %v1444 = vpop.f32.mrb[0].mxu0
        %1445 = vmatprep.mubr.f32.mxu0 0.0
        %1446 = vmatmul.mubr.f32.gmra.mrb[0].mxu0 %v1176
        %v1447 = vpop.f32.mrb[0].mxu0
        %v1448 = vadd.f32 %v1151, %v1447
        %v1449 = vpop.f32.mrb[0].mxu0
        %1450 = vmatprep.mubr.f32.mxu0 0.0
        %1451 = vmatmul.mubr.f32.gmra.mrb[0].mxu0 %v1179
        %v1452 = vpop.f32.mrb[0].mxu0
        %v1453 = vadd.f32 %v1151, %v1452
        %v1454 = vpop.f32.mrb[0].mxu0
        %1455 = vmatprep.mubr.f32.mxu0 0.0
        %1456 = vmatmul.mubr.f32.gmra.mrb[0].mxu0 %v1182
        %v1457 = vpop.f32.mrb[0].mxu0
        %v1458 = vadd.f32 %v1151, %v1457
        %v1459 = vpop.f32.mrb[0].mxu0
        %1460 = vmatprep.mubr.f32.mxu0 0.0
        %1461 = vmatmul.mubr.f32.gmra.mrb[0].mxu0 %v1185
        %v1462 = vpop.f32.mrb[0].mxu0
        %v1463 = vadd.f32 %v1151, %v1462
        %v1464 = vpop.f32.mrb[0].mxu0
        %1465 = vmatprep.mubr.f32.mxu0 0.0
        %1466 = vmatmul.mubr.f32.gmra.mrb[0].mxu0 %v1188
        %v1467 = vpop.f32.mrb[0].mxu0
        %v1468 = vadd.f32 %v1151, %v1467
        %v1469 = vpop.f32.mrb[0].mxu0
        %1470 = vmatprep.mubr.f32.mxu0 0.0
        %1471 = vmatmul.mubr.f32.gmra.mrb[0].mxu0 %v1191
        %v1472 = vpop.f32.mrb[0].mxu0
        %v1473 = vadd.f32 %v1151, %v1472
        %v1474 = vpop.f32.mrb[0].mxu0
        %1475 = vmatprep.mubr.f32.mxu0 0.0
        %1476 = vmatmul.mubr.f32.gmra.mrb[0].mxu0 %v1194
        %v1477 = vpop.f32.mrb[0].mxu0
        %v1478 = vadd.f32 %v1151, %v1477
        %v1479 = vpop.f32.mrb[0].mxu0
        %1480 = vmatprep.mubr.f32.mxu0 0.0
        %1481 = vmatmul.mubr.f32.gmra.mrb[0].mxu0 %v1197
        %v1482 = vpop.f32.mrb[0].mxu0
        %v1483 = vadd.f32 %v1151, %v1482
        %v1484 = vpop.f32.mrb[0].mxu0
        %1485 = vmatprep.mubr.f32.mxu0 0.0
        %1486 = vmatmul.mubr.f32.gmra.mrb[0].mxu0 %v1200
        %v1487 = vpop.f32.mrb[0].mxu0
        %v1488 = vadd.f32 %v1151, %v1487
        %v1489 = vpop.f32.mrb[0].mxu0
        %1490 = vmatprep.mubr.f32.mxu0 0.0
        %1491 = vmatmul.mubr.f32.gmra.mrb[0].mxu0 %v1203
        %v1492 = vpop.f32.mrb[0].mxu0
        %v1493 = vadd.f32 %v1151, %v1492
        %v1494 = vpop.f32.mrb[0].mxu0
        %1495 = vmatprep.mubr.f32.mxu0 0.0
        %1496 = vmatmul.mubr.f32.gmra.mrb[0].mxu0 %v1206
        %v1497 = vpop.f32.mrb[0].mxu0
        %v1498 = vadd.f32 %v1151, %v1497
        %v1499 = vpop.f32.mrb[0].mxu0
        %1500 = vmatprep.mubr.f32.mxu0 0.0
        %1501 = vmatmul.mubr.f32.gmra.mrb[0].mxu0 %v1209
        %v1502 = vpop.f32.mrb[0].mxu0
        %v1503 = vadd.f32 %v1151, %v1502
        %v1504 = vpop.f32.mrb[0].mxu0
        %1505 = vmatprep.mubr.f32.mxu0 0.0
        %1506 = vmatmul.mubr.f32.gmra.mrb[0].mxu0 %v1212
        %v1507 = vpop.f32.mrb[0].mxu0
        %v1508 = vadd.f32 %v1151, %v1507
        %v1509 = vpop.f32.mrb[0].mxu0
        %1510 = vmatprep.mubr.f32.mxu0 0.0
        %1511 = vmatmul.mubr.f32.gmra.mrb[0].mxu0 %v1215
        %v1512 = vpop.f32.mrb[0].mxu0
        %v1513 = vadd.f32 %v1151, %v1512
        %v1514 = vpop.f32.mrb[0].mxu0
        %1515 = vmatprep.mubr.f32.mxu0 0.0
        %1516 = vmatmul.mubr.f32.gmra.mrb[0].mxu0 %v1218
        %v1517 = vpop.f32.mrb[0].mxu0
        %v1518 = vadd.f32 %v1151, %v1517
        %v1519 = vpop.f32.mrb[0].mxu0
        %1520 = vmatprep.mubr.f32.mxu0 0.0
        %1521 = vmatmul.mubr.f32.gmra.mrb[0].mxu0 %v1221
        %v1522 = vpop.f32.mrb[0].mxu0
        %v1523 = vadd.f32 %v1151, %v1522
        %v1524 = vpop.f32.mrb[0].mxu0
        %1525 = vmatprep.mubr.f32.mxu0 0.0
        %1526 = vmatmul.mubr.f32.gmra.mrb[0].mxu0 %v1224
        %v1527 = vpop.f32.mrb[0].mxu0
        %v1528 = vadd.f32 %v1151, %v1527
        %v1529 = vpop.f32.mrb[0].mxu0
        %1530 = vmatprep.mubr.f32.mxu0 0.0
        %1531 = vmatmul.mubr.f32.gmra.mrb[0].mxu0 %v1227
        %v1532 = vpop.f32.mrb[0].mxu0
        %v1533 = vadd.f32 %v1151, %v1532
        %v1534 = vpop.f32.mrb[0].mxu0
        %1535 = vmatprep.mubr.f32.mxu0 0.0
        %1536 = vmatmul.mubr.f32.gmra.mrb[0].mxu0 %v1230
        %v1537 = vpop.f32.mrb[0].mxu0
        %v1538 = vadd.f32 %v1151, %v1537
        %v1539 = vpop.f32.mrb[0].mxu0
        %1540 = vmatprep.mubr.f32.mxu0 0.0
        %1541 = vmatmul.mubr.f32.gmra.mrb[0].mxu0 %v1233
        %v1542 = vpop.f32.mrb[0].mxu0
        %v1543 = vadd.f32 %v1151, %v1542
        %v1544 = vpop.f32.mrb[0].mxu0
        %1545 = vmatprep.mubr.f32.mxu0 0.0
        %1546 = vmatmul.mubr.f32.gmra.mrb[0].mxu0 %v1236
        %v1547 = vpop.f32.mrb[0].mxu0
        %v1548 = vadd.f32 %v1151, %v1547
        %v1549 = vpop.f32.mrb[0].mxu0
        %1550 = vmatprep.mubr.f32.mxu0 0.0
        %1551 = vmatmul.mubr.f32.gmra.mrb[0].mxu0 %v1239
        %v1552 = vpop.f32.mrb[0].mxu0
        %v1553 = vadd.f32 %v1151, %v1552
        %v1554 = vpop.f32.mrb[0].mxu0
        %1555 = vmatprep.mubr.f32.mxu0 0.0
        %1556 = vmatmul.mubr.f32.gmra.mrb[0].mxu0 %v1242
        %v1557 = vpop.f32.mrb[0].mxu0
        %v1558 = vadd.f32 %v1151, %v1557
        %v1559 = vpop.f32.mrb[0].mxu0
        %1560 = vmatprep.mubr.f32.mxu0 0.0
        %1561 = vmatmul.mubr.f32.gmra.mrb[0].mxu0 %v1245
        %v1562 = vpop.f32.mrb[0].mxu0
        %v1563 = vadd.f32 %v1151, %v1562
        %v1564 = vpop.f32.mrb[0].mxu0
        %1565 = vmatprep.mubr.f32.mxu0 0.0
        %1566 = vmatmul.mubr.f32.gmra.mrb[0].mxu0 %v1248
        %v1567 = vpop.f32.mrb[0].mxu0
        %v1568 = vadd.f32 %v1151, %v1567
        %v1569 = vpop.f32.mrb[0].mxu0
        %1570 = vmatprep.mubr.f32.mxu0 0.0
        %1571 = vmatmul.mubr.f32.gmra.mrb[0].mxu0 %v1251
        %v1572 = vpop.f32.mrb[0].mxu0
        %v1573 = vadd.f32 %v1151, %v1572
        %v1574 = vpop.f32.mrb[0].mxu0
        %1575 = vmatprep.mubr.f32.mxu0 0.0
        %1576 = vmatmul.mubr.f32.gmra.mrb[0].mxu0 %v1254
        %v1577 = vpop.f32.mrb[0].mxu0
        %v1578 = vadd.f32 %v1151, %v1577
        %v1579 = vpop.f32.mrb[0].mxu0
        %1580 = vmatprep.mubr.f32.mxu0 0.0
        %1581 = vmatmul.mubr.f32.gmra.mrb[0].mxu0 %v1257
        %v1582 = vpop.f32.mrb[0].mxu0
        %v1583 = vadd.f32 %v1151, %v1582
        %v1584 = vpop.f32.mrb[0].mxu0
        %1585 = vmatprep.mubr.f32.mxu0 0.0
        %1586 = vmatmul.mubr.f32.gmra.mrb[0].mxu0 %v1260
        %v1587 = vpop.f32.mrb[0].mxu0
        %v1588 = vadd.f32 %v1151, %v1587
        %v1589 = vpop.f32.mrb[0].mxu0
        %1590 = vmatprep.mubr.f32.mxu0 0.0
        %1591 = vmatmul.mubr.f32.gmra.mrb[0].mxu0 %v1263
        %v1592 = vpop.f32.mrb[0].mxu0
        %v1593 = vadd.f32 %v1151, %v1592
        %v1594 = vpop.f32.mrb[0].mxu0
        %1595 = vmatprep.mubr.f32.mxu0 0.0
        %1596 = vmatmul.mubr.f32.gmra.mrb[0].mxu0 %v1266
        %v1597 = vpop.f32.mrb[0].mxu0
        %v1598 = vadd.f32 %v1151, %v1597
        %v1599 = vpop.f32.mrb[0].mxu0
        %1600 = vmatprep.mubr.f32.mxu0 0.0
        %1601 = vmatmul.mubr.f32.gmra.mrb[0].mxu0 %v1269
        %v1602 = vpop.f32.mrb[0].mxu0
        %v1603 = vadd.f32 %v1151, %v1602
        %v1604 = vpop.f32.mrb[0].mxu0
        %1605 = vmatprep.mubr.f32.mxu0 0.0
        %1606 = vmatmul.mubr.f32.gmra.mrb[0].mxu0 %v1272
        %v1607 = vpop.f32.mrb[0].mxu0
        %v1608 = vadd.f32 %v1151, %v1607
        %v1609 = vpop.f32.mrb[0].mxu0
        %1610 = vmatprep.mubr.f32.mxu0 0.0
        %1611 = vmatmul.mubr.f32.gmra.mrb[0].mxu0 %v1275
        %v1612 = vpop.f32.mrb[0].mxu0
        %v1613 = vadd.f32 %v1151, %v1612
        %v1614 = vpop.f32.mrb[0].mxu0
        %1615 = vmatprep.mubr.f32.mxu0 0.0
        %1616 = vmatmul.mubr.f32.gmra.mrb[0].mxu0 %v1278
        %v1617 = vpop.f32.mrb[0].mxu0
        %v1618 = vadd.f32 %v1151, %v1617
        %v1619 = vpop.f32.mrb[0].mxu0
        %1620 = vmatprep.mubr.f32.mxu0 0.0
        %1621 = vmatmul.mubr.f32.gmra.mrb[0].mxu0 %v1281
        %v1622 = vpop.f32.mrb[0].mxu0
        %v1623 = vadd.f32 %v1151, %v1622
        %v1624 = vpop.f32.mrb[0].mxu0
        %1625 = vmatprep.mubr.f32.mxu0 0.0
        %1626 = vmatmul.mubr.f32.gmra.mrb[0].mxu0 %v1284
        %v1627 = vpop.f32.mrb[0].mxu0
        %v1628 = vadd.f32 %v1151, %v1627
        %v1629 = vpop.f32.mrb[0].mxu0
        %1630 = vmatprep.mubr.f32.mxu0 0.0
        %1631 = vmatmul.mubr.f32.gmra.mrb[0].mxu0 %v1287
        %v1632 = vpop.f32.mrb[0].mxu0
        %v1633 = vadd.f32 %v1151, %v1632
        %v1634 = vpop.f32.mrb[0].mxu0
        %1635 = vmatprep.mubr.f32.mxu0 0.0
        %1636 = vmatmul.mubr.f32.gmra.mrb[0].mxu0 %v1290
        %v1637 = vpop.f32.mrb[0].mxu0
        %v1638 = vadd.f32 %v1151, %v1637
        %v1639 = vpop.f32.mrb[0].mxu0
        %1640 = vmatprep.mubr.f32.mxu0 0.0
        %1641 = vmatmul.mubr.f32.gmra.mrb[0].mxu0 %v1293
        %v1642 = vpop.f32.mrb[0].mxu0
        %v1643 = vadd.f32 %v1151, %v1642
        %v1644 = vpop.f32.mrb[0].mxu0
        %1645 = vmatprep.mubr.f32.mxu0 0.0
        %1646 = vmatmul.mubr.f32.gmra.mrb[0].mxu0 %v1296
        %v1647 = vpop.f32.mrb[0].mxu0
        %v1648 = vadd.f32 %v1151, %v1647
        %v1649 = vpop.f32.mrb[0].mxu0
        %1650 = vmatprep.mubr.f32.mxu0 0.0
        %1651 = vmatmul.mubr.f32.gmra.mrb[0].mxu0 %v1299
        %v1652 = vpop.f32.mrb[0].mxu0
        %v1653 = vadd.f32 %v1151, %v1652
        %v1654 = vpop.f32.mrb[0].mxu0
        %1655 = vmatprep.mubr.f32.mxu0 0.0
        %1656 = vmatmul.mubr.f32.gmra.mrb[0].mxu0 %v1302
        %v1657 = vpop.f32.mrb[0].mxu0
        %v1658 = vadd.f32 %v1151, %v1657
        %v1659 = vpop.f32.mrb[0].mxu0
        %1660 = vmatprep.mubr.f32.mxu0 0.0
        %1661 = vmatmul.mubr.f32.gmra.mrb[0].mxu0 %v1305
        %v1662 = vpop.f32.mrb[0].mxu0
        %v1663 = vadd.f32 %v1151, %v1662
        %v1664 = vpop.f32.mrb[0].mxu0
        %1665 = vmatprep.mubr.f32.mxu0 0.0
        %1666 = vmatmul.mubr.f32.gmra.mrb[0].mxu0 %v1308
        %v1667 = vpop.f32.mrb[0].mxu0
        %v1668 = vadd.f32 %v1151, %v1667
        %v1669 = vpop.f32.mrb[0].mxu0
        %1670 = vmatprep.mubr.f32.mxu0 0.0
        %1671 = vmatmul.mubr.f32.gmra.mrb[0].mxu0 %v1311
        %v1672 = vpop.f32.mrb[0].mxu0
        %v1673 = vadd.f32 %v1151, %v1672
        %v1674 = vpop.f32.mrb[0].mxu0
        %1675 = vmatprep.mubr.f32.mxu0 0.0
        %1676 = vmatmul.mubr.f32.gmra.mrb[0].mxu0 %v1314
        %v1677 = vpop.f32.mrb[0].mxu0
        %v1678 = vadd.f32 %v1151, %v1677
        %v1679 = vpop.f32.mrb[0].mxu0
        %1680 = vmatprep.mubr.f32.mxu0 0.0
        %1681 = vmatmul.mubr.f32.gmra.mrb[0].mxu0 %v1317
        %v1682 = vpop.f32.mrb[0].mxu0
        %v1683 = vadd.f32 %v1151, %v1682
        %v1684 = vpop.f32.mrb[0].mxu0
        %1685 = vmatprep.mubr.f32.mxu0 0.0
        %1686 = vmatmul.mubr.f32.gmra.mrb[0].mxu0 %v1320
        %v1687 = vpop.f32.mrb[0].mxu0
        %v1688 = vadd.f32 %v1151, %v1687
        %v1689 = vpop.f32.mrb[0].mxu0
        %1690 = vmatprep.mubr.f32.mxu0 0.0
        %1691 = vmatmul.mubr.f32.gmra.mrb[0].mxu0 %v1323
        %v1692 = vpop.f32.mrb[0].mxu0
        %v1693 = vadd.f32 %v1151, %v1692
        %v1694 = vpop.f32.mrb[0].mxu0
        %1695 = vmatprep.mubr.f32.mxu0 0.0
        %1696 = vmatmul.mubr.f32.gmra.mrb[0].mxu0 %v1326
        %v1697 = vpop.f32.mrb[0].mxu0
        %v1698 = vadd.f32 %v1151, %v1697
        %v1699 = vpop.f32.mrb[0].mxu0
        %1700 = vmatprep.mubr.f32.mxu0 0.0
        %1701 = vmatmul.mubr.f32.gmra.mrb[0].mxu0 %v1329
        %v1702 = vpop.f32.mrb[0].mxu0
        %v1703 = vadd.f32 %v1151, %v1702
        %v1704 = vpop.f32.mrb[0].mxu0
        %1705 = vmatprep.mubr.f32.mxu0 0.0
        %1706 = vmatmul.mubr.f32.gmra.mrb[0].mxu0 %v1332
        %v1707 = vpop.f32.mrb[0].mxu0
        %v1708 = vadd.f32 %v1151, %v1707
        %v1709 = vpop.f32.mrb[0].mxu0
        %1710 = vmatprep.mubr.f32.mxu0 0.0
        %1711 = vmatmul.mubr.f32.gmra.mrb[0].mxu0 %v1335
        %v1712 = vpop.f32.mrb[0].mxu0
        %v1713 = vadd.f32 %v1151, %v1712
        %v1714 = vpop.f32.mrb[0].mxu0
        %1715 = vmatprep.mubr.f32.mxu0 0.0
        %1716 = vmatmul.mubr.f32.gmra.mrb[0].mxu0 %v1338
        %v1717 = vpop.f32.mrb[0].mxu0
        %v1718 = vadd.f32 %v1151, %v1717
        %v1719 = vpop.f32.mrb[0].mxu0
        %1720 = vmatprep.mubr.f32.mxu0 0.0
        %1721 = vmatmul.mubr.f32.gmra.mrb[0].mxu0 %v1341
        %v1722 = vpop.f32.mrb[0].mxu0
        %v1723 = vadd.f32 %v1151, %v1722
        %v1724 = vpop.f32.mrb[0].mxu0
        %1725 = vmatprep.mubr.f32.mxu0 0.0
        %1726 = vmatmul.mubr.f32.gmra.mrb[0].mxu0 %v1344
        %v1727 = vpop.f32.mrb[0].mxu0
        %v1728 = vadd.f32 %v1151, %v1727
        %v1729 = vpop.f32.mrb[0].mxu0
        %1730 = vdwg.mxu0
        %vm1731 = vcmp.gt.f32.partialorder %v1413, 0.0
        %vm1732 = vcmp.gt.f32.partialorder %v1418, 0.0
        %vm1733 = vcmp.gt.f32.partialorder %v1423, 0.0
        %vm1734 = vcmp.gt.f32.partialorder %v1428, 0.0
        %vm1735 = vcmp.gt.f32.partialorder %v1433, 0.0
        %vm1736 = vcmp.gt.f32.partialorder %v1438, 0.0
        %vm1737 = vcmp.gt.f32.partialorder %v1443, 0.0
        %vm1738 = vcmp.gt.f32.partialorder %v1448, 0.0
        %vm1739 = vcmp.gt.f32.partialorder %v1453, 0.0
        %vm1740 = vcmp.gt.f32.partialorder %v1458, 0.0
        %vm1741 = vcmp.gt.f32.partialorder %v1463, 0.0
        %vm1742 = vcmp.gt.f32.partialorder %v1468, 0.0
        %vm1743 = vcmp.gt.f32.partialorder %v1473, 0.0
        %vm1744 = vcmp.gt.f32.partialorder %v1478, 0.0
        %vm1745 = vcmp.gt.f32.partialorder %v1483, 0.0
        %vm1746 = vcmp.gt.f32.partialorder %v1488, 0.0
        %vm1747 = vcmp.gt.f32.partialorder %v1493, 0.0
        %vm1748 = vcmp.gt.f32.partialorder %v1498, 0.0
        %vm1749 = vcmp.gt.f32.partialorder %v1503, 0.0
        %vm1750 = vcmp.gt.f32.partialorder %v1508, 0.0
        %vm1751 = vcmp.gt.f32.partialorder %v1513, 0.0
        %vm1752 = vcmp.gt.f32.partialorder %v1518, 0.0
        %vm1753 = vcmp.gt.f32.partialorder %v1523, 0.0
        %vm1754 = vcmp.gt.f32.partialorder %v1528, 0.0
        %vm1755 = vcmp.gt.f32.partialorder %v1533, 0.0
        %vm1756 = vcmp.gt.f32.partialorder %v1538, 0.0
        %vm1757 = vcmp.gt.f32.partialorder %v1543, 0.0
        %vm1758 = vcmp.gt.f32.partialorder %v1548, 0.0
        %vm1759 = vcmp.gt.f32.partialorder %v1553, 0.0
        %vm1760 = vcmp.gt.f32.partialorder %v1558, 0.0
        %vm1761 = vcmp.gt.f32.partialorder %v1563, 0.0
        %vm1762 = vcmp.gt.f32.partialorder %v1568, 0.0
        %vm1763 = vcmp.gt.f32.partialorder %v1573, 0.0
        %vm1764 = vcmp.gt.f32.partialorder %v1578, 0.0
        %vm1765 = vcmp.gt.f32.partialorder %v1583, 0.0
        %vm1766 = vcmp.gt.f32.partialorder %v1588, 0.0
        %vm1767 = vcmp.gt.f32.partialorder %v1593, 0.0
        %vm1768 = vcmp.gt.f32.partialorder %v1598, 0.0
        %vm1769 = vcmp.gt.f32.partialorder %v1603, 0.0
        %vm1770 = vcmp.gt.f32.partialorder %v1608, 0.0
        %vm1771 = vcmp.gt.f32.partialorder %v1613, 0.0
        %vm1772 = vcmp.gt.f32.partialorder %v1618, 0.0
        %vm1773 = vcmp.gt.f32.partialorder %v1623, 0.0
        %vm1774 = vcmp.gt.f32.partialorder %v1628, 0.0
        %vm1775 = vcmp.gt.f32.partialorder %v1633, 0.0
        %vm1776 = vcmp.gt.f32.partialorder %v1638, 0.0
        %vm1777 = vcmp.gt.f32.partialorder %v1643, 0.0
        %vm1778 = vcmp.gt.f32.partialorder %v1648, 0.0
        %vm1779 = vcmp.gt.f32.partialorder %v1653, 0.0
        %vm1780 = vcmp.gt.f32.partialorder %v1658, 0.0
        %vm1781 = vcmp.gt.f32.partialorder %v1663, 0.0
        %vm1782 = vcmp.gt.f32.partialorder %v1668, 0.0
        %vm1783 = vcmp.gt.f32.partialorder %v1673, 0.0
        %vm1784 = vcmp.gt.f32.partialorder %v1678, 0.0
        %vm1785 = vcmp.gt.f32.partialorder %v1683, 0.0
        %vm1786 = vcmp.gt.f32.partialorder %v1688, 0.0
        %vm1787 = vcmp.gt.f32.partialorder %v1693, 0.0
        %vm1788 = vcmp.gt.f32.partialorder %v1698, 0.0
        %vm1789 = vcmp.gt.f32.partialorder %v1703, 0.0
        %vm1790 = vcmp.gt.f32.partialorder %v1708, 0.0
        %vm1791 = vcmp.gt.f32.partialorder %v1713, 0.0
        %vm1792 = vcmp.gt.f32.partialorder %v1718, 0.0
        %vm1793 = vcmp.gt.f32.partialorder %v1723, 0.0
        %vm1794 = vcmp.gt.f32.partialorder %v1728, 0.0
        %v1795 = vmul.f32 %v1413, 0.01
        %v1796 = vmul.f32 %v1418, 0.01
        %v1797 = vmul.f32 %v1423, 0.01
        %v1798 = vmul.f32 %v1428, 0.01
        %v1799 = vmul.f32 %v1433, 0.01
        %v1800 = vmul.f32 %v1438, 0.01
        %v1801 = vmul.f32 %v1443, 0.01
        %v1802 = vmul.f32 %v1448, 0.01
        %v1803 = vmul.f32 %v1453, 0.01
        %v1804 = vmul.f32 %v1458, 0.01
        %v1805 = vmul.f32 %v1463, 0.01
        %v1806 = vmul.f32 %v1468, 0.01
        %v1807 = vmul.f32 %v1473, 0.01
        %v1808 = vmul.f32 %v1478, 0.01
        %v1809 = vmul.f32 %v1483, 0.01
        %v1810 = vmul.f32 %v1488, 0.01
        %v1811 = vmul.f32 %v1493, 0.01
        %v1812 = vmul.f32 %v1498, 0.01
        %v1813 = vmul.f32 %v1503, 0.01
        %v1814 = vmul.f32 %v1508, 0.01
        %v1815 = vmul.f32 %v1513, 0.01
        %v1816 = vmul.f32 %v1518, 0.01
        %v1817 = vmul.f32 %v1523, 0.01
        %v1818 = vmul.f32 %v1528, 0.01
        %v1819 = vmul.f32 %v1533, 0.01
        %v1820 = vmul.f32 %v1538, 0.01
        %v1821 = vmul.f32 %v1543, 0.01
        %v1822 = vmul.f32 %v1548, 0.01
        %v1823 = vmul.f32 %v1553, 0.01
        %v1824 = vmul.f32 %v1558, 0.01
        %v1825 = vmul.f32 %v1563, 0.01
        %v1826 = vmul.f32 %v1568, 0.01
        %v1827 = vmul.f32 %v1573, 0.01
        %v1828 = vmul.f32 %v1578, 0.01
        %v1829 = vmul.f32 %v1583, 0.01
        %v1830 = vmul.f32 %v1588, 0.01
        %v1831 = vmul.f32 %v1593, 0.01
        %v1832 = vmul.f32 %v1598, 0.01
        %v1833 = vmul.f32 %v1603, 0.01
        %v1834 = vmul.f32 %v1608, 0.01
        %v1835 = vmul.f32 %v1613, 0.01
        %v1836 = vmul.f32 %v1618, 0.01
        %v1837 = vmul.f32 %v1623, 0.01
        %v1838 = vmul.f32 %v1628, 0.01
        %v1839 = vmul.f32 %v1633, 0.01
        %v1840 = vmul.f32 %v1638, 0.01
        %v1841 = vmul.f32 %v1643, 0.01
        %v1842 = vmul.f32 %v1648, 0.01
        %v1843 = vmul.f32 %v1653, 0.01
        %v1844 = vmul.f32 %v1658, 0.01
        %v1845 = vmul.f32 %v1663, 0.01
        %v1846 = vmul.f32 %v1668, 0.01
        %v1847 = vmul.f32 %v1673, 0.01
        %v1848 = vmul.f32 %v1678, 0.01
        %v1849 = vmul.f32 %v1683, 0.01
        %v1850 = vmul.f32 %v1688, 0.01
        %v1851 = vmul.f32 %v1693, 0.01
        %v1852 = vmul.f32 %v1698, 0.01
        %v1853 = vmul.f32 %v1703, 0.01
        %v1854 = vmul.f32 %v1708, 0.01
        %v1855 = vmul.f32 %v1713, 0.01
        %v1856 = vmul.f32 %v1718, 0.01
        %v1857 = vmul.f32 %v1723, 0.01
        %v1858 = vmul.f32 %v1728, 0.01
        %v1859 = vsel %vm1731, %v1413, %v1795
        %v1860 = vsel %vm1732, %v1418, %v1796
        %v1861 = vsel %vm1733, %v1423, %v1797
        %v1862 = vsel %vm1734, %v1428, %v1798
        %v1863 = vsel %vm1735, %v1433, %v1799
        %v1864 = vsel %vm1736, %v1438, %v1800
        %v1865 = vsel %vm1737, %v1443, %v1801
        %v1866 = vsel %vm1738, %v1448, %v1802
        %v1867 = vsel %vm1739, %v1453, %v1803
        %v1868 = vsel %vm1740, %v1458, %v1804
        %v1869 = vsel %vm1741, %v1463, %v1805
        %v1870 = vsel %vm1742, %v1468, %v1806
        %v1871 = vsel %vm1743, %v1473, %v1807
        %v1872 = vsel %vm1744, %v1478, %v1808
        %v1873 = vsel %vm1745, %v1483, %v1809
        %v1874 = vsel %vm1746, %v1488, %v1810
        %v1875 = vsel %vm1747, %v1493, %v1811
        %v1876 = vsel %vm1748, %v1498, %v1812
        %v1877 = vsel %vm1749, %v1503, %v1813
        %v1878 = vsel %vm1750, %v1508, %v1814
        %v1879 = vsel %vm1751, %v1513, %v1815
        %v1880 = vsel %vm1752, %v1518, %v1816
        %v1881 = vsel %vm1753, %v1523, %v1817
        %v1882 = vsel %vm1754, %v1528, %v1818
        %v1883 = vsel %vm1755, %v1533, %v1819
        %v1884 = vsel %vm1756, %v1538, %v1820
        %v1885 = vsel %vm1757, %v1543, %v1821
        %v1886 = vsel %vm1758, %v1548, %v1822
        %v1887 = vsel %vm1759, %v1553, %v1823
        %v1888 = vsel %vm1760, %v1558, %v1824
        %v1889 = vsel %vm1761, %v1563, %v1825
        %v1890 = vsel %vm1762, %v1568, %v1826
        %v1891 = vsel %vm1763, %v1573, %v1827
        %v1892 = vsel %vm1764, %v1578, %v1828
        %v1893 = vsel %vm1765, %v1583, %v1829
        %v1894 = vsel %vm1766, %v1588, %v1830
        %v1895 = vsel %vm1767, %v1593, %v1831
        %v1896 = vsel %vm1768, %v1598, %v1832
        %v1897 = vsel %vm1769, %v1603, %v1833
        %v1898 = vsel %vm1770, %v1608, %v1834
        %v1899 = vsel %vm1771, %v1613, %v1835
        %v1900 = vsel %vm1772, %v1618, %v1836
        %v1901 = vsel %vm1773, %v1623, %v1837
        %v1902 = vsel %vm1774, %v1628, %v1838
        %v1903 = vsel %vm1775, %v1633, %v1839
        %v1904 = vsel %vm1776, %v1638, %v1840
        %v1905 = vsel %vm1777, %v1643, %v1841
        %v1906 = vsel %vm1778, %v1648, %v1842
        %v1907 = vsel %vm1779, %v1653, %v1843
        %v1908 = vsel %vm1780, %v1658, %v1844
        %v1909 = vsel %vm1781, %v1663, %v1845
        %v1910 = vsel %vm1782, %v1668, %v1846
        %v1911 = vsel %vm1783, %v1673, %v1847
        %v1912 = vsel %vm1784, %v1678, %v1848
        %v1913 = vsel %vm1785, %v1683, %v1849
        %v1914 = vsel %vm1786, %v1688, %v1850
        %v1915 = vsel %vm1787, %v1693, %v1851
        %v1916 = vsel %vm1788, %v1698, %v1852
        %v1917 = vsel %vm1789, %v1703, %v1853
        %v1918 = vsel %vm1790, %v1708, %v1854
        %v1919 = vsel %vm1791, %v1713, %v1855
        %v1920 = vsel %vm1792, %v1718, %v1856
        %v1921 = vsel %vm1793, %v1723, %v1857
        %v1922 = vsel %vm1794, %v1728, %v1858
        %v1923 = vld [vmem:[%s5] sm:$0xff]
        %v1924 = vld [vmem:[%s5 + $0x8] sm:$0xff]
        %v1925 = vld [vmem:[%s5 + $0x10] sm:$0xff]
        %v1926 = vld [vmem:[%s5 + $0x18] sm:$0xff]
        %v1927 = vld [vmem:[%s6] sm:$0x1]
        %v1929 = vlaneseq
        %v1930 = vshrl.u32 %v1929, 7
        %v1931 = vsub.s32 0, %v1930
        %v1932 = vrot.slane %v1927, %v1931
        %v1935 = vsel %vm1153, %v1859, 0
        %v1938 = vsel %vm1153, %v1860, 0
        %v1941 = vsel %vm1153, %v1861, 0
        %v1944 = vsel %vm1153, %v1862, 0
        %v1947 = vsel %vm1153, %v1863, 0
        %v1950 = vsel %vm1153, %v1864, 0
        %v1953 = vsel %vm1153, %v1865, 0
        %v1956 = vsel %vm1153, %v1866, 0
        %v1959 = vsel %vm1153, %v1867, 0
        %v1962 = vsel %vm1153, %v1868, 0
        %v1965 = vsel %vm1153, %v1869, 0
        %v1968 = vsel %vm1153, %v1870, 0
        %v1971 = vsel %vm1153, %v1871, 0
        %v1974 = vsel %vm1153, %v1872, 0
        %v1977 = vsel %vm1153, %v1873, 0
        %v1980 = vsel %vm1153, %v1874, 0
        %v1983 = vsel %vm1153, %v1875, 0
        %v1986 = vsel %vm1153, %v1876, 0
        %v1989 = vsel %vm1153, %v1877, 0
        %v1992 = vsel %vm1153, %v1878, 0
        %v1995 = vsel %vm1153, %v1879, 0
        %v1998 = vsel %vm1153, %v1880, 0
        %v2001 = vsel %vm1153, %v1881, 0
        %v2004 = vsel %vm1153, %v1882, 0
        %v2007 = vsel %vm1153, %v1883, 0
        %v2010 = vsel %vm1153, %v1884, 0
        %v2013 = vsel %vm1153, %v1885, 0
        %v2016 = vsel %vm1153, %v1886, 0
        %v2019 = vsel %vm1153, %v1887, 0
        %v2022 = vsel %vm1153, %v1888, 0
        %v2025 = vsel %vm1153, %v1889, 0
        %v2028 = vsel %vm1153, %v1890, 0
        %v2031 = vsel %vm1153, %v1891, 0
        %v2034 = vsel %vm1153, %v1892, 0
        %v2037 = vsel %vm1153, %v1893, 0
        %v2040 = vsel %vm1153, %v1894, 0
        %v2043 = vsel %vm1153, %v1895, 0
        %v2046 = vsel %vm1153, %v1896, 0
        %v2049 = vsel %vm1153, %v1897, 0
        %v2052 = vsel %vm1153, %v1898, 0
        %v2055 = vsel %vm1153, %v1899, 0
        %v2058 = vsel %vm1153, %v1900, 0
        %v2061 = vsel %vm1153, %v1901, 0
        %v2064 = vsel %vm1153, %v1902, 0
        %v2067 = vsel %vm1153, %v1903, 0
        %v2070 = vsel %vm1153, %v1904, 0
        %v2073 = vsel %vm1153, %v1905, 0
        %v2076 = vsel %vm1153, %v1906, 0
        %v2079 = vsel %vm1153, %v1907, 0
        %v2082 = vsel %vm1153, %v1908, 0
        %v2085 = vsel %vm1153, %v1909, 0
        %v2088 = vsel %vm1153, %v1910, 0
        %v2091 = vsel %vm1153, %v1911, 0
        %v2094 = vsel %vm1153, %v1912, 0
        %v2097 = vsel %vm1153, %v1913, 0
        %v2100 = vsel %vm1153, %v1914, 0
        %v2103 = vsel %vm1153, %v1915, 0
        %v2106 = vsel %vm1153, %v1916, 0
        %v2109 = vsel %vm1153, %v1917, 0
        %v2112 = vsel %vm1153, %v1918, 0
        %v2115 = vsel %vm1153, %v1919, 0
        %v2118 = vsel %vm1153, %v1920, 0
        %v2121 = vsel %vm1153, %v1921, 0
        %v2124 = vsel %vm1153, %v1922, 0
        %2126 = vmatprep.subr.mxu0 0.0
        %2127 = vmatpush1.msra.mxu0 %v1923
        %2128 = vmatprep.subr.mxu0 0.0
        %2129 = vmatpush1.msra.mxu0 %v1924
        %2130 = vmatprep.subr.mxu0 0.0
        %2131 = vmatpush1.msra.mxu0 %v1925
        %2132 = vmatprep.subr.mxu0 0.0
        %2133 = vmatpush1.msra.mxu0 %v1926
        %2134 = vmatprep.subr.mxu0 0.0
        %2135 = vmatpush1.msra.mxu0 0.0
        %2136 = vmatprep.subr.mxu0 0.0
        %2137 = vmatpush1.msra.mxu0 0.0
        %2138 = vmatprep.subr.mxu0 0.0
        %2139 = vmatpush1.msra.mxu0 0.0
        %2140 = vmatprep.subr.mxu0 0.0
        %2141 = vmatpush1.msra.mxu0 0.0
        %2142 = vmatprep.subr.mxu0 0.0
        %2143 = vmatpush1.msra.mxu0 0.0
        %2144 = vmatprep.subr.mxu0 0.0
        %2145 = vmatpush1.msra.mxu0 0.0
        %2146 = vmatprep.subr.mxu0 0.0
        %2147 = vmatpush1.msra.mxu0 0.0
        %2148 = vmatprep.subr.mxu0 0.0
        %2149 = vmatpush1.msra.mxu0 0.0
        %2150 = vmatprep.subr.mxu0 0.0
        %2151 = vmatpush1.msra.mxu0 0.0
        %2152 = vmatprep.subr.mxu0 0.0
        %2153 = vmatpush1.msra.mxu0 0.0
        %2154 = vmatprep.subr.mxu0 0.0
        %2155 = vmatpush1.msra.mxu0 0.0
        %2156 = vmatprep.subr.mxu0 0.0
        %2157 = vmatpush1.msra.mxu0 0.0
        %2158 = vmatprep.subr.mxu0 0.0
        %2159 = vmatpush1.msra.mxu0 0.0
        %2160 = vmatprep.subr.mxu0 0.0
        %2161 = vmatpush1.msra.mxu0 0.0
        %2162 = vmatprep.subr.mxu0 0.0
        %2163 = vmatpush1.msra.mxu0 0.0
        %2164 = vmatprep.subr.mxu0 0.0
        %2165 = vmatpush1.msra.mxu0 0.0
        %2166 = vmatprep.subr.mxu0 0.0
        %2167 = vmatpush1.msra.mxu0 0.0
        %2168 = vmatprep.subr.mxu0 0.0
        %2169 = vmatpush1.msra.mxu0 0.0
        %2170 = vmatprep.subr.mxu0 0.0
        %2171 = vmatpush1.msra.mxu0 0.0
        %2172 = vmatprep.subr.mxu0 0.0
        %2173 = vmatpush1.msra.mxu0 0.0
        %2174 = vmatprep.subr.mxu0 0.0
        %2175 = vmatpush1.msra.mxu0 0.0
        %2176 = vmatprep.subr.mxu0 0.0
        %2177 = vmatpush1.msra.mxu0 0.0
        %2178 = vmatprep.subr.mxu0 0.0
        %2179 = vmatpush1.msra.mxu0 0.0
        %2180 = vmatprep.subr.mxu0 0.0
        %2181 = vmatpush1.msra.mxu0 0.0
        %2182 = vmatprep.subr.mxu0 0.0
        %2183 = vmatpush1.msra.mxu0 0.0
        %2184 = vmatprep.subr.mxu0 0.0
        %2185 = vmatpush1.msra.mxu0 0.0
        %2186 = vmatprep.subr.mxu0 0.0
        %2187 = vmatpush1.msra.mxu0 0.0
        %2188 = vmatprep.subr.mxu0 0.0
        %2189 = vmatpush1.msra.mxu0 0.0
        %2190 = vmatprep.mubr.f32.mxu0 0.0
        %2191 = vmatmul.mubr.f32.gmra.mrb[0].mxu0 %v1935
        %v2192 = vpop.f32.mrb[0].mxu0
        %v2193 = vadd.f32 %v1932, %v2192
        %v2194 = vpop.f32.mrb[0].mxu0
        %2195 = vmatprep.mubr.f32.mxu0 0.0
        %2196 = vmatmul.mubr.f32.gmra.mrb[0].mxu0 %v1938
        %v2197 = vpop.f32.mrb[0].mxu0
        %v2198 = vadd.f32 %v1932, %v2197
        %v2199 = vpop.f32.mrb[0].mxu0
        %2200 = vmatprep.mubr.f32.mxu0 0.0
        %2201 = vmatmul.mubr.f32.gmra.mrb[0].mxu0 %v1941
        %v2202 = vpop.f32.mrb[0].mxu0
        %v2203 = vadd.f32 %v1932, %v2202
        %v2204 = vpop.f32.mrb[0].mxu0
        %2205 = vmatprep.mubr.f32.mxu0 0.0
        %2206 = vmatmul.mubr.f32.gmra.mrb[0].mxu0 %v1944
        %v2207 = vpop.f32.mrb[0].mxu0
        %v2208 = vadd.f32 %v1932, %v2207
        %v2209 = vpop.f32.mrb[0].mxu0
        %2210 = vmatprep.mubr.f32.mxu0 0.0
        %2211 = vmatmul.mubr.f32.gmra.mrb[0].mxu0 %v1947
        %v2212 = vpop.f32.mrb[0].mxu0
        %v2213 = vadd.f32 %v1932, %v2212
        %v2214 = vpop.f32.mrb[0].mxu0
        %2215 = vmatprep.mubr.f32.mxu0 0.0
        %2216 = vmatmul.mubr.f32.gmra.mrb[0].mxu0 %v1950
        %v2217 = vpop.f32.mrb[0].mxu0
        %v2218 = vadd.f32 %v1932, %v2217
        %v2219 = vpop.f32.mrb[0].mxu0
        %2220 = vmatprep.mubr.f32.mxu0 0.0
        %2221 = vmatmul.mubr.f32.gmra.mrb[0].mxu0 %v1953
        %v2222 = vpop.f32.mrb[0].mxu0
        %v2223 = vadd.f32 %v1932, %v2222
        %v2224 = vpop.f32.mrb[0].mxu0
        %2225 = vmatprep.mubr.f32.mxu0 0.0
        %2226 = vmatmul.mubr.f32.gmra.mrb[0].mxu0 %v1956
        %v2227 = vpop.f32.mrb[0].mxu0
        %v2228 = vadd.f32 %v1932, %v2227
        %v2229 = vpop.f32.mrb[0].mxu0
        %2230 = vmatprep.mubr.f32.mxu0 0.0
        %2231 = vmatmul.mubr.f32.gmra.mrb[0].mxu0 %v1959
        %v2232 = vpop.f32.mrb[0].mxu0
        %v2233 = vadd.f32 %v1932, %v2232
        %v2234 = vpop.f32.mrb[0].mxu0
        %2235 = vmatprep.mubr.f32.mxu0 0.0
        %2236 = vmatmul.mubr.f32.gmra.mrb[0].mxu0 %v1962
        %v2237 = vpop.f32.mrb[0].mxu0
        %v2238 = vadd.f32 %v1932, %v2237
        %v2239 = vpop.f32.mrb[0].mxu0
        %2240 = vmatprep.mubr.f32.mxu0 0.0
        %2241 = vmatmul.mubr.f32.gmra.mrb[0].mxu0 %v1965
        %v2242 = vpop.f32.mrb[0].mxu0
        %v2243 = vadd.f32 %v1932, %v2242
        %v2244 = vpop.f32.mrb[0].mxu0
        %2245 = vmatprep.mubr.f32.mxu0 0.0
        %2246 = vmatmul.mubr.f32.gmra.mrb[0].mxu0 %v1968
        %v2247 = vpop.f32.mrb[0].mxu0
        %v2248 = vadd.f32 %v1932, %v2247
        %v2249 = vpop.f32.mrb[0].mxu0
        %2250 = vmatprep.mubr.f32.mxu0 0.0
        %2251 = vmatmul.mubr.f32.gmra.mrb[0].mxu0 %v1971
        %v2252 = vpop.f32.mrb[0].mxu0
        %v2253 = vadd.f32 %v1932, %v2252
        %v2254 = vpop.f32.mrb[0].mxu0
        %2255 = vmatprep.mubr.f32.mxu0 0.0
        %2256 = vmatmul.mubr.f32.gmra.mrb[0].mxu0 %v1974
        %v2257 = vpop.f32.mrb[0].mxu0
        %v2258 = vadd.f32 %v1932, %v2257
        %v2259 = vpop.f32.mrb[0].mxu0
        %2260 = vmatprep.mubr.f32.mxu0 0.0
        %2261 = vmatmul.mubr.f32.gmra.mrb[0].mxu0 %v1977
        %v2262 = vpop.f32.mrb[0].mxu0
        %v2263 = vadd.f32 %v1932, %v2262
        %v2264 = vpop.f32.mrb[0].mxu0
        %2265 = vmatprep.mubr.f32.mxu0 0.0
        %2266 = vmatmul.mubr.f32.gmra.mrb[0].mxu0 %v1980
        %v2267 = vpop.f32.mrb[0].mxu0
        %v2268 = vadd.f32 %v1932, %v2267
        %v2269 = vpop.f32.mrb[0].mxu0
        %2270 = vmatprep.mubr.f32.mxu0 0.0
        %2271 = vmatmul.mubr.f32.gmra.mrb[0].mxu0 %v1983
        %v2272 = vpop.f32.mrb[0].mxu0
        %v2273 = vadd.f32 %v1932, %v2272
        %v2274 = vpop.f32.mrb[0].mxu0
        %2275 = vmatprep.mubr.f32.mxu0 0.0
        %2276 = vmatmul.mubr.f32.gmra.mrb[0].mxu0 %v1986
        %v2277 = vpop.f32.mrb[0].mxu0
        %v2278 = vadd.f32 %v1932, %v2277
        %v2279 = vpop.f32.mrb[0].mxu0
        %2280 = vmatprep.mubr.f32.mxu0 0.0
        %2281 = vmatmul.mubr.f32.gmra.mrb[0].mxu0 %v1989
        %v2282 = vpop.f32.mrb[0].mxu0
        %v2283 = vadd.f32 %v1932, %v2282
        %v2284 = vpop.f32.mrb[0].mxu0
        %2285 = vmatprep.mubr.f32.mxu0 0.0
        %2286 = vmatmul.mubr.f32.gmra.mrb[0].mxu0 %v1992
        %v2287 = vpop.f32.mrb[0].mxu0
        %v2288 = vadd.f32 %v1932, %v2287
        %v2289 = vpop.f32.mrb[0].mxu0
        %2290 = vmatprep.mubr.f32.mxu0 0.0
        %2291 = vmatmul.mubr.f32.gmra.mrb[0].mxu0 %v1995
        %v2292 = vpop.f32.mrb[0].mxu0
        %v2293 = vadd.f32 %v1932, %v2292
        %v2294 = vpop.f32.mrb[0].mxu0
        %2295 = vmatprep.mubr.f32.mxu0 0.0
        %2296 = vmatmul.mubr.f32.gmra.mrb[0].mxu0 %v1998
        %v2297 = vpop.f32.mrb[0].mxu0
        %v2298 = vadd.f32 %v1932, %v2297
        %v2299 = vpop.f32.mrb[0].mxu0
        %2300 = vmatprep.mubr.f32.mxu0 0.0
        %2301 = vmatmul.mubr.f32.gmra.mrb[0].mxu0 %v2001
        %v2302 = vpop.f32.mrb[0].mxu0
        %v2303 = vadd.f32 %v1932, %v2302
        %v2304 = vpop.f32.mrb[0].mxu0
        %2305 = vmatprep.mubr.f32.mxu0 0.0
        %2306 = vmatmul.mubr.f32.gmra.mrb[0].mxu0 %v2004
        %v2307 = vpop.f32.mrb[0].mxu0
        %v2308 = vadd.f32 %v1932, %v2307
        %v2309 = vpop.f32.mrb[0].mxu0
        %2310 = vmatprep.mubr.f32.mxu0 0.0
        %2311 = vmatmul.mubr.f32.gmra.mrb[0].mxu0 %v2007
        %v2312 = vpop.f32.mrb[0].mxu0
        %v2313 = vadd.f32 %v1932, %v2312
        %v2314 = vpop.f32.mrb[0].mxu0
        %2315 = vmatprep.mubr.f32.mxu0 0.0
        %2316 = vmatmul.mubr.f32.gmra.mrb[0].mxu0 %v2010
        %v2317 = vpop.f32.mrb[0].mxu0
        %v2318 = vadd.f32 %v1932, %v2317
        %v2319 = vpop.f32.mrb[0].mxu0
        %2320 = vmatprep.mubr.f32.mxu0 0.0
        %2321 = vmatmul.mubr.f32.gmra.mrb[0].mxu0 %v2013
        %v2322 = vpop.f32.mrb[0].mxu0
        %v2323 = vadd.f32 %v1932, %v2322
        %v2324 = vpop.f32.mrb[0].mxu0
        %2325 = vmatprep.mubr.f32.mxu0 0.0
        %2326 = vmatmul.mubr.f32.gmra.mrb[0].mxu0 %v2016
        %v2327 = vpop.f32.mrb[0].mxu0
        %v2328 = vadd.f32 %v1932, %v2327
        %v2329 = vpop.f32.mrb[0].mxu0
        %2330 = vmatprep.mubr.f32.mxu0 0.0
        %2331 = vmatmul.mubr.f32.gmra.mrb[0].mxu0 %v2019
        %v2332 = vpop.f32.mrb[0].mxu0
        %v2333 = vadd.f32 %v1932, %v2332
        %v2334 = vpop.f32.mrb[0].mxu0
        %2335 = vmatprep.mubr.f32.mxu0 0.0
        %2336 = vmatmul.mubr.f32.gmra.mrb[0].mxu0 %v2022
        %v2337 = vpop.f32.mrb[0].mxu0
        %v2338 = vadd.f32 %v1932, %v2337
        %v2339 = vpop.f32.mrb[0].mxu0
        %2340 = vmatprep.mubr.f32.mxu0 0.0
        %2341 = vmatmul.mubr.f32.gmra.mrb[0].mxu0 %v2025
        %v2342 = vpop.f32.mrb[0].mxu0
        %v2343 = vadd.f32 %v1932, %v2342
        %v2344 = vpop.f32.mrb[0].mxu0
        %2345 = vmatprep.mubr.f32.mxu0 0.0
        %2346 = vmatmul.mubr.f32.gmra.mrb[0].mxu0 %v2028
        %v2347 = vpop.f32.mrb[0].mxu0
        %v2348 = vadd.f32 %v1932, %v2347
        %v2349 = vpop.f32.mrb[0].mxu0
        %2350 = vmatprep.mubr.f32.mxu0 0.0
        %2351 = vmatmul.mubr.f32.gmra.mrb[0].mxu0 %v2031
        %v2352 = vpop.f32.mrb[0].mxu0
        %v2353 = vadd.f32 %v1932, %v2352
        %v2354 = vpop.f32.mrb[0].mxu0
        %2355 = vmatprep.mubr.f32.mxu0 0.0
        %2356 = vmatmul.mubr.f32.gmra.mrb[0].mxu0 %v2034
        %v2357 = vpop.f32.mrb[0].mxu0
        %v2358 = vadd.f32 %v1932, %v2357
        %v2359 = vpop.f32.mrb[0].mxu0
        %2360 = vmatprep.mubr.f32.mxu0 0.0
        %2361 = vmatmul.mubr.f32.gmra.mrb[0].mxu0 %v2037
        %v2362 = vpop.f32.mrb[0].mxu0
        %v2363 = vadd.f32 %v1932, %v2362
        %v2364 = vpop.f32.mrb[0].mxu0
        %2365 = vmatprep.mubr.f32.mxu0 0.0
        %2366 = vmatmul.mubr.f32.gmra.mrb[0].mxu0 %v2040
        %v2367 = vpop.f32.mrb[0].mxu0
        %v2368 = vadd.f32 %v1932, %v2367
        %v2369 = vpop.f32.mrb[0].mxu0
        %2370 = vmatprep.mubr.f32.mxu0 0.0
        %2371 = vmatmul.mubr.f32.gmra.mrb[0].mxu0 %v2043
        %v2372 = vpop.f32.mrb[0].mxu0
        %v2373 = vadd.f32 %v1932, %v2372
        %v2374 = vpop.f32.mrb[0].mxu0
        %2375 = vmatprep.mubr.f32.mxu0 0.0
        %2376 = vmatmul.mubr.f32.gmra.mrb[0].mxu0 %v2046
        %v2377 = vpop.f32.mrb[0].mxu0
        %v2378 = vadd.f32 %v1932, %v2377
        %v2379 = vpop.f32.mrb[0].mxu0
        %2380 = vmatprep.mubr.f32.mxu0 0.0
        %2381 = vmatmul.mubr.f32.gmra.mrb[0].mxu0 %v2049
        %v2382 = vpop.f32.mrb[0].mxu0
        %v2383 = vadd.f32 %v1932, %v2382
        %v2384 = vpop.f32.mrb[0].mxu0
        %2385 = vmatprep.mubr.f32.mxu0 0.0
        %2386 = vmatmul.mubr.f32.gmra.mrb[0].mxu0 %v2052
        %v2387 = vpop.f32.mrb[0].mxu0
        %v2388 = vadd.f32 %v1932, %v2387
        %v2389 = vpop.f32.mrb[0].mxu0
        %2390 = vmatprep.mubr.f32.mxu0 0.0
        %2391 = vmatmul.mubr.f32.gmra.mrb[0].mxu0 %v2055
        %v2392 = vpop.f32.mrb[0].mxu0
        %v2393 = vadd.f32 %v1932, %v2392
        %v2394 = vpop.f32.mrb[0].mxu0
        %2395 = vmatprep.mubr.f32.mxu0 0.0
        %2396 = vmatmul.mubr.f32.gmra.mrb[0].mxu0 %v2058
        %v2397 = vpop.f32.mrb[0].mxu0
        %v2398 = vadd.f32 %v1932, %v2397
        %v2399 = vpop.f32.mrb[0].mxu0
        %2400 = vmatprep.mubr.f32.mxu0 0.0
        %2401 = vmatmul.mubr.f32.gmra.mrb[0].mxu0 %v2061
        %v2402 = vpop.f32.mrb[0].mxu0
        %v2403 = vadd.f32 %v1932, %v2402
        %v2404 = vpop.f32.mrb[0].mxu0
        %2405 = vmatprep.mubr.f32.mxu0 0.0
        %2406 = vmatmul.mubr.f32.gmra.mrb[0].mxu0 %v2064
        %v2407 = vpop.f32.mrb[0].mxu0
        %v2408 = vadd.f32 %v1932, %v2407
        %v2409 = vpop.f32.mrb[0].mxu0
        %2410 = vmatprep.mubr.f32.mxu0 0.0
        %2411 = vmatmul.mubr.f32.gmra.mrb[0].mxu0 %v2067
        %v2412 = vpop.f32.mrb[0].mxu0
        %v2413 = vadd.f32 %v1932, %v2412
        %v2414 = vpop.f32.mrb[0].mxu0
        %2415 = vmatprep.mubr.f32.mxu0 0.0
        %2416 = vmatmul.mubr.f32.gmra.mrb[0].mxu0 %v2070
        %v2417 = vpop.f32.mrb[0].mxu0
        %v2418 = vadd.f32 %v1932, %v2417
        %v2419 = vpop.f32.mrb[0].mxu0
        %2420 = vmatprep.mubr.f32.mxu0 0.0
        %2421 = vmatmul.mubr.f32.gmra.mrb[0].mxu0 %v2073
        %v2422 = vpop.f32.mrb[0].mxu0
        %v2423 = vadd.f32 %v1932, %v2422
        %v2424 = vpop.f32.mrb[0].mxu0
        %2425 = vmatprep.mubr.f32.mxu0 0.0
        %2426 = vmatmul.mubr.f32.gmra.mrb[0].mxu0 %v2076
        %v2427 = vpop.f32.mrb[0].mxu0
        %v2428 = vadd.f32 %v1932, %v2427
        %v2429 = vpop.f32.mrb[0].mxu0
        %2430 = vmatprep.mubr.f32.mxu0 0.0
        %2431 = vmatmul.mubr.f32.gmra.mrb[0].mxu0 %v2079
        %v2432 = vpop.f32.mrb[0].mxu0
        %v2433 = vadd.f32 %v1932, %v2432
        %v2434 = vpop.f32.mrb[0].mxu0
        %2435 = vmatprep.mubr.f32.mxu0 0.0
        %2436 = vmatmul.mubr.f32.gmra.mrb[0].mxu0 %v2082
        %v2437 = vpop.f32.mrb[0].mxu0
        %v2438 = vadd.f32 %v1932, %v2437
        %v2439 = vpop.f32.mrb[0].mxu0
        %2440 = vmatprep.mubr.f32.mxu0 0.0
        %2441 = vmatmul.mubr.f32.gmra.mrb[0].mxu0 %v2085
        %v2442 = vpop.f32.mrb[0].mxu0
        %v2443 = vadd.f32 %v1932, %v2442
        %v2444 = vpop.f32.mrb[0].mxu0
        %2445 = vmatprep.mubr.f32.mxu0 0.0
        %2446 = vmatmul.mubr.f32.gmra.mrb[0].mxu0 %v2088
        %v2447 = vpop.f32.mrb[0].mxu0
        %v2448 = vadd.f32 %v1932, %v2447
        %v2449 = vpop.f32.mrb[0].mxu0
        %2450 = vmatprep.mubr.f32.mxu0 0.0
        %2451 = vmatmul.mubr.f32.gmra.mrb[0].mxu0 %v2091
        %v2452 = vpop.f32.mrb[0].mxu0
        %v2453 = vadd.f32 %v1932, %v2452
        %v2454 = vpop.f32.mrb[0].mxu0
        %2455 = vmatprep.mubr.f32.mxu0 0.0
        %2456 = vmatmul.mubr.f32.gmra.mrb[0].mxu0 %v2094
        %v2457 = vpop.f32.mrb[0].mxu0
        %v2458 = vadd.f32 %v1932, %v2457
        %v2459 = vpop.f32.mrb[0].mxu0
        %2460 = vmatprep.mubr.f32.mxu0 0.0
        %2461 = vmatmul.mubr.f32.gmra.mrb[0].mxu0 %v2097
        %v2462 = vpop.f32.mrb[0].mxu0
        %v2463 = vadd.f32 %v1932, %v2462
        %v2464 = vpop.f32.mrb[0].mxu0
        %2465 = vmatprep.mubr.f32.mxu0 0.0
        %2466 = vmatmul.mubr.f32.gmra.mrb[0].mxu0 %v2100
        %v2467 = vpop.f32.mrb[0].mxu0
        %v2468 = vadd.f32 %v1932, %v2467
        %v2469 = vpop.f32.mrb[0].mxu0
        %2470 = vmatprep.mubr.f32.mxu0 0.0
        %2471 = vmatmul.mubr.f32.gmra.mrb[0].mxu0 %v2103
        %v2472 = vpop.f32.mrb[0].mxu0
        %v2473 = vadd.f32 %v1932, %v2472
        %v2474 = vpop.f32.mrb[0].mxu0
        %2475 = vmatprep.mubr.f32.mxu0 0.0
        %2476 = vmatmul.mubr.f32.gmra.mrb[0].mxu0 %v2106
        %v2477 = vpop.f32.mrb[0].mxu0
        %v2478 = vadd.f32 %v1932, %v2477
        %v2479 = vpop.f32.mrb[0].mxu0
        %2480 = vmatprep.mubr.f32.mxu0 0.0
        %2481 = vmatmul.mubr.f32.gmra.mrb[0].mxu0 %v2109
        %v2482 = vpop.f32.mrb[0].mxu0
        %v2483 = vadd.f32 %v1932, %v2482
        %v2484 = vpop.f32.mrb[0].mxu0
        %2485 = vmatprep.mubr.f32.mxu0 0.0
        %2486 = vmatmul.mubr.f32.gmra.mrb[0].mxu0 %v2112
        %v2487 = vpop.f32.mrb[0].mxu0
        %v2488 = vadd.f32 %v1932, %v2487
        %v2489 = vpop.f32.mrb[0].mxu0
        %2490 = vmatprep.mubr.f32.mxu0 0.0
        %2491 = vmatmul.mubr.f32.gmra.mrb[0].mxu0 %v2115
        %v2492 = vpop.f32.mrb[0].mxu0
        %v2493 = vadd.f32 %v1932, %v2492
        %v2494 = vpop.f32.mrb[0].mxu0
        %2495 = vmatprep.mubr.f32.mxu0 0.0
        %2496 = vmatmul.mubr.f32.gmra.mrb[0].mxu0 %v2118
        %v2497 = vpop.f32.mrb[0].mxu0
        %v2498 = vadd.f32 %v1932, %v2497
        %v2499 = vpop.f32.mrb[0].mxu0
        %2500 = vmatprep.mubr.f32.mxu0 0.0
        %2501 = vmatmul.mubr.f32.gmra.mrb[0].mxu0 %v2121
        %v2502 = vpop.f32.mrb[0].mxu0
        %v2503 = vadd.f32 %v1932, %v2502
        %v2504 = vpop.f32.mrb[0].mxu0
        %2505 = vmatprep.mubr.f32.mxu0 0.0
        %2506 = vmatmul.mubr.f32.gmra.mrb[0].mxu0 %v2124
        %v2507 = vpop.f32.mrb[0].mxu0
        %v2508 = vadd.f32 %v1932, %v2507
        %v2509 = vpop.f32.mrb[0].mxu0
        %2510 = vdwg.mxu0
        %v2511 = vtanh.pop %v2193
        %v2512 = vtanh.pop %v2198
        %v2513 = vtanh.pop %v2203
        %v2514 = vtanh.pop %v2208
        %v2515 = vtanh.pop %v2213
        %v2516 = vtanh.pop %v2218
        %v2517 = vtanh.pop %v2223
        %v2518 = vtanh.pop %v2228
        %v2519 = vtanh.pop %v2233
        %v2520 = vtanh.pop %v2238
        %v2521 = vtanh.pop %v2243
        %v2522 = vtanh.pop %v2248
        %v2523 = vtanh.pop %v2253
        %v2524 = vtanh.pop %v2258
        %v2525 = vtanh.pop %v2263
        %v2526 = vtanh.pop %v2268
        %v2527 = vtanh.pop %v2273
        %v2528 = vtanh.pop %v2278
        %v2529 = vtanh.pop %v2283
        %v2530 = vtanh.pop %v2288
        %v2531 = vtanh.pop %v2293
        %v2532 = vtanh.pop %v2298
        %v2533 = vtanh.pop %v2303
        %v2534 = vtanh.pop %v2308
        %v2535 = vtanh.pop %v2313
        %v2536 = vtanh.pop %v2318
        %v2537 = vtanh.pop %v2323
        %v2538 = vtanh.pop %v2328
        %v2539 = vtanh.pop %v2333
        %v2540 = vtanh.pop %v2338
        %v2541 = vtanh.pop %v2343
        %v2542 = vtanh.pop %v2348
        %v2543 = vtanh.pop %v2353
        %v2544 = vtanh.pop %v2358
        %v2545 = vtanh.pop %v2363
        %v2546 = vtanh.pop %v2368
        %v2547 = vtanh.pop %v2373
        %v2548 = vtanh.pop %v2378
        %v2549 = vtanh.pop %v2383
        %v2550 = vtanh.pop %v2388
        %v2551 = vtanh.pop %v2393
        %v2552 = vtanh.pop %v2398
        %v2553 = vtanh.pop %v2403
        %v2554 = vtanh.pop %v2408
        %v2555 = vtanh.pop %v2413
        %v2556 = vtanh.pop %v2418
        %v2557 = vtanh.pop %v2423
        %v2558 = vtanh.pop %v2428
        %v2559 = vtanh.pop %v2433
        %v2560 = vtanh.pop %v2438
        %v2561 = vtanh.pop %v2443
        %v2562 = vtanh.pop %v2448
        %v2563 = vtanh.pop %v2453
        %v2564 = vtanh.pop %v2458
        %v2565 = vtanh.pop %v2463
        %v2566 = vtanh.pop %v2468
        %v2567 = vtanh.pop %v2473
        %v2568 = vtanh.pop %v2478
        %v2569 = vtanh.pop %v2483
        %v2570 = vtanh.pop %v2488
        %v2571 = vtanh.pop %v2493
        %v2572 = vtanh.pop %v2498
        %v2573 = vtanh.pop %v2503
        %v2574 = vtanh.pop %v2508
        %2575 = vst.msk [vmem:[%s280] sm:$0xff] %vm372, %v2511
        %2576 = vst.msk [vmem:[%s280 + $0x8] sm:$0xff] %vm372, %v2512
        %2577 = vst.msk [vmem:[%s280 + $0x10] sm:$0xff] %vm372, %v2513
        %2578 = vst.msk [vmem:[%s280 + $0x18] sm:$0xff] %vm372, %v2514
        %2579 = vst.msk [vmem:[%s280 + $0x20] sm:$0xff] %vm372, %v2515
        %2580 = vst.msk [vmem:[%s280 + $0x28] sm:$0xff] %vm372, %v2516
        %2581 = vst.msk [vmem:[%s280 + $0x30] sm:$0xff] %vm372, %v2517
        %2582 = vst.msk [vmem:[%s280 + $0x38] sm:$0xff] %vm372, %v2518
        %2583 = vst.msk [vmem:[%s280 + $0x40] sm:$0xff] %vm372, %v2519
        %2584 = vst.msk [vmem:[%s280 + $0x48] sm:$0xff] %vm372, %v2520
        %2585 = vst.msk [vmem:[%s280 + $0x50] sm:$0xff] %vm372, %v2521
        %2586 = vst.msk [vmem:[%s280 + $0x58] sm:$0xff] %vm372, %v2522
        %2587 = vst.msk [vmem:[%s280 + $0x60] sm:$0xff] %vm372, %v2523
        %2588 = vst.msk [vmem:[%s280 + $0x68] sm:$0xff] %vm372, %v2524
        %2589 = vst.msk [vmem:[%s280 + $0x70] sm:$0xff] %vm372, %v2525
        %2590 = vst.msk [vmem:[%s280 + $0x78] sm:$0xff] %vm372, %v2526
        %2591 = vst.msk [vmem:[%s280 + $0x80] sm:$0xff] %vm372, %v2527
        %2592 = vst.msk [vmem:[%s280 + $0x88] sm:$0xff] %vm372, %v2528
        %2593 = vst.msk [vmem:[%s280 + $0x90] sm:$0xff] %vm372, %v2529
        %2594 = vst.msk [vmem:[%s280 + $0x98] sm:$0xff] %vm372, %v2530
        %2595 = vst.msk [vmem:[%s280 + $0xa0] sm:$0xff] %vm372, %v2531
        %2596 = vst.msk [vmem:[%s280 + $0xa8] sm:$0xff] %vm372, %v2532
        %2597 = vst.msk [vmem:[%s280 + $0xb0] sm:$0xff] %vm372, %v2533
        %2598 = vst.msk [vmem:[%s280 + $0xb8] sm:$0xff] %vm372, %v2534
        %2599 = vst.msk [vmem:[%s280 + $0xc0] sm:$0xff] %vm372, %v2535
        %2600 = vst.msk [vmem:[%s280 + $0xc8] sm:$0xff] %vm372, %v2536
        %2601 = vst.msk [vmem:[%s280 + $0xd0] sm:$0xff] %vm372, %v2537
        %2602 = vst.msk [vmem:[%s280 + $0xd8] sm:$0xff] %vm372, %v2538
        %2603 = vst.msk [vmem:[%s280 + $0xe0] sm:$0xff] %vm372, %v2539
        %2604 = vst.msk [vmem:[%s280 + $0xe8] sm:$0xff] %vm372, %v2540
        %2605 = vst.msk [vmem:[%s280 + $0xf0] sm:$0xff] %vm372, %v2541
        %2606 = vst.msk [vmem:[%s280 + $0xf8] sm:$0xff] %vm372, %v2542
        %2607 = vst.msk [vmem:[%s280 + $0x100] sm:$0xff] %vm372, %v2543
        %2608 = vst.msk [vmem:[%s280 + $0x108] sm:$0xff] %vm372, %v2544
        %2609 = vst.msk [vmem:[%s280 + $0x110] sm:$0xff] %vm372, %v2545
        %2610 = vst.msk [vmem:[%s280 + $0x118] sm:$0xff] %vm372, %v2546
        %2611 = vst.msk [vmem:[%s280 + $0x120] sm:$0xff] %vm372, %v2547
        %2612 = vst.msk [vmem:[%s280 + $0x128] sm:$0xff] %vm372, %v2548
        %2613 = vst.msk [vmem:[%s280 + $0x130] sm:$0xff] %vm372, %v2549
        %2614 = vst.msk [vmem:[%s280 + $0x138] sm:$0xff] %vm372, %v2550
        %2615 = vst.msk [vmem:[%s280 + $0x140] sm:$0xff] %vm372, %v2551
        %2616 = vst.msk [vmem:[%s280 + $0x148] sm:$0xff] %vm372, %v2552
        %2617 = vst.msk [vmem:[%s280 + $0x150] sm:$0xff] %vm372, %v2553
        %2618 = vst.msk [vmem:[%s280 + $0x158] sm:$0xff] %vm372, %v2554
        %2619 = vst.msk [vmem:[%s280 + $0x160] sm:$0xff] %vm372, %v2555
        %2620 = vst.msk [vmem:[%s280 + $0x168] sm:$0xff] %vm372, %v2556
        %2621 = vst.msk [vmem:[%s280 + $0x170] sm:$0xff] %vm372, %v2557
        %2622 = vst.msk [vmem:[%s280 + $0x178] sm:$0xff] %vm372, %v2558
        %2623 = vst.msk [vmem:[%s280 + $0x180] sm:$0xff] %vm372, %v2559
        %2624 = vst.msk [vmem:[%s280 + $0x188] sm:$0xff] %vm372, %v2560
        %2625 = vst.msk [vmem:[%s280 + $0x190] sm:$0xff] %vm372, %v2561
        %2626 = vst.msk [vmem:[%s280 + $0x198] sm:$0xff] %vm372, %v2562
        %2627 = vst.msk [vmem:[%s280 + $0x1a0] sm:$0xff] %vm372, %v2563
        %2628 = vst.msk [vmem:[%s280 + $0x1a8] sm:$0xff] %vm372, %v2564
        %2629 = vst.msk [vmem:[%s280 + $0x1b0] sm:$0xff] %vm372, %v2565
        %2630 = vst.msk [vmem:[%s280 + $0x1b8] sm:$0xff] %vm372, %v2566
        %2631 = vst.msk [vmem:[%s280 + $0x1c0] sm:$0xff] %vm372, %v2567
        %2632 = vst.msk [vmem:[%s280 + $0x1c8] sm:$0xff] %vm372, %v2568
        %2633 = vst.msk [vmem:[%s280 + $0x1d0] sm:$0xff] %vm372, %v2569
        %2634 = vst.msk [vmem:[%s280 + $0x1d8] sm:$0xff] %vm372, %v2570
        %2635 = vst.msk [vmem:[%s280 + $0x1e0] sm:$0xff] %vm372, %v2571
        %2636 = vst.msk [vmem:[%s280 + $0x1e8] sm:$0xff] %vm372, %v2572
        %2637 = vst.msk [vmem:[%s280 + $0x1f0] sm:$0xff] %vm372, %v2573
        %2638 = vst.msk [vmem:[%s280 + $0x1f8] sm:$0xff] %vm372, %v2574
        %s2639 = sand.u32 %s178, 1
        %s2640 = sand.u32 %s178, 1
        %s2641 = smul.addr %s2640, 512
        %s2642 = scalar_lea.vmem [#allocation2], %s2641
        // Predicated region
        $region49: #{net_forward.1} parent=47 // pred_check
          %p2643 = pneg %p188
        $region50: #{net_forward.1} parent=47 // pred_check_branch
          %2645 = sbr.rel (%p2643) target = $region52
        $region51: #{net_forward.1} parent=47 // pred_region
          %s2646 = smul.u32 64, %s18
          %s2647 = ssub.s32 125, %s2646
          %p2648 = scmp.lt.s32.totalorder %s2647, 64
          %s2649 = scalar_select %p2648, %s2647, 64
          %s2650 = smul.u32 128, %s2649
          %p2651 = scmp.ne.s32.totalorder 0, %s2650
          %s2652 = smul.addr %s2646, 8
          %s2653 = scalar_lea.vmem %s7, %s2652
          // Predicated region
          $region53: #{net_forward.1} parent=51 // pred_check
            %p2654 = pneg %p2651
          $region54: #{net_forward.1} parent=51 // pred_check_branch
            %2656 = sbr.rel (%p2654) target = $region56
          $region55: #{net_forward.1} parent=51 // pred_region
            // Predicated region
            $region57: #{net_forward.1} parent=55 // pred_check
              _
            $region58: #{net_forward.1} parent=55 // pred_check_branch
              %2658 = sbr.rel (0) target = $region60
            $region59: #{net_forward.1} parent=55 // pred_region
              // Predicated region
              $region79: #{net_forward.1} parent=59 // pred_check
                _
              $region80: #{net_forward.1} parent=59 // pred_check_branch
                %2833 = sbr.rel (0) target = $region82
              $region81: #{net_forward.1} parent=59 // pred_region
                %s2834 = sshrl.u32 %s2649, 6
                // While loop
                $region83: #{net_forward.1} parent=81 // loop_pre_header
                  _
                $region84: #{net_forward.1} parent=81 // loop_header
                  %s2836 = sphi 0, %s2838
                  %p2837 = scmp.ge.s32.totalorder %s2836, %s2834
                  %s2841 = sphi 0, %s2974
                  %s2842 = sphi %s2642, %s2977
                  %s2843 = sphi %s2653, %s2978
                $region85: #{net_forward.1} parent=81 // loop_header_branch
                  %2840 = sbr.rel (%p2837) target = $region89
                $region86: #{net_forward.1} parent=81 // loop_body
                  %v2844 = vld [vmem:[%s2842] sm:$0xff]
                  %2845 = vst [vmem:[%s2843] sm:$0xff] %v2844
                  %v2846 = vld [vmem:[%s2842 + $0x8] sm:$0xff]
                  %2847 = vst [vmem:[%s2843 + $0x8] sm:$0xff] %v2846
                  %v2848 = vld [vmem:[%s2842 + $0x10] sm:$0xff]
                  %2849 = vst [vmem:[%s2843 + $0x10] sm:$0xff] %v2848
                  %v2850 = vld [vmem:[%s2842 + $0x18] sm:$0xff]
                  %2851 = vst [vmem:[%s2843 + $0x18] sm:$0xff] %v2850
                  %v2852 = vld [vmem:[%s2842 + $0x20] sm:$0xff]
                  %2853 = vst [vmem:[%s2843 + $0x20] sm:$0xff] %v2852
                  %v2854 = vld [vmem:[%s2842 + $0x28] sm:$0xff]
                  %2855 = vst [vmem:[%s2843 + $0x28] sm:$0xff] %v2854
                  %v2856 = vld [vmem:[%s2842 + $0x30] sm:$0xff]
                  %2857 = vst [vmem:[%s2843 + $0x30] sm:$0xff] %v2856
                  %v2858 = vld [vmem:[%s2842 + $0x38] sm:$0xff]
                  %2859 = vst [vmem:[%s2843 + $0x38] sm:$0xff] %v2858
                  %v2860 = vld [vmem:[%s2842 + $0x40] sm:$0xff]
                  %2861 = vst [vmem:[%s2843 + $0x40] sm:$0xff] %v2860
                  %v2862 = vld [vmem:[%s2842 + $0x48] sm:$0xff]
                  %2863 = vst [vmem:[%s2843 + $0x48] sm:$0xff] %v2862
                  %v2864 = vld [vmem:[%s2842 + $0x50] sm:$0xff]
                  %2865 = vst [vmem:[%s2843 + $0x50] sm:$0xff] %v2864
                  %v2866 = vld [vmem:[%s2842 + $0x58] sm:$0xff]
                  %2867 = vst [vmem:[%s2843 + $0x58] sm:$0xff] %v2866
                  %v2868 = vld [vmem:[%s2842 + $0x60] sm:$0xff]
                  %2869 = vst [vmem:[%s2843 + $0x60] sm:$0xff] %v2868
                  %v2870 = vld [vmem:[%s2842 + $0x68] sm:$0xff]
                  %2871 = vst [vmem:[%s2843 + $0x68] sm:$0xff] %v2870
                  %v2872 = vld [vmem:[%s2842 + $0x70] sm:$0xff]
                  %2873 = vst [vmem:[%s2843 + $0x70] sm:$0xff] %v2872
                  %v2874 = vld [vmem:[%s2842 + $0x78] sm:$0xff]
                  %2875 = vst [vmem:[%s2843 + $0x78] sm:$0xff] %v2874
                  %v2876 = vld [vmem:[%s2842 + $0x80] sm:$0xff]
                  %2877 = vst [vmem:[%s2843 + $0x80] sm:$0xff] %v2876
                  %v2878 = vld [vmem:[%s2842 + $0x88] sm:$0xff]
                  %2879 = vst [vmem:[%s2843 + $0x88] sm:$0xff] %v2878
                  %v2880 = vld [vmem:[%s2842 + $0x90] sm:$0xff]
                  %2881 = vst [vmem:[%s2843 + $0x90] sm:$0xff] %v2880
                  %v2882 = vld [vmem:[%s2842 + $0x98] sm:$0xff]
                  %2883 = vst [vmem:[%s2843 + $0x98] sm:$0xff] %v2882
                  %v2884 = vld [vmem:[%s2842 + $0xa0] sm:$0xff]
                  %2885 = vst [vmem:[%s2843 + $0xa0] sm:$0xff] %v2884
                  %v2886 = vld [vmem:[%s2842 + $0xa8] sm:$0xff]
                  %2887 = vst [vmem:[%s2843 + $0xa8] sm:$0xff] %v2886
                  %v2888 = vld [vmem:[%s2842 + $0xb0] sm:$0xff]
                  %2889 = vst [vmem:[%s2843 + $0xb0] sm:$0xff] %v2888
                  %v2890 = vld [vmem:[%s2842 + $0xb8] sm:$0xff]
                  %2891 = vst [vmem:[%s2843 + $0xb8] sm:$0xff] %v2890
                  %v2892 = vld [vmem:[%s2842 + $0xc0] sm:$0xff]
                  %2893 = vst [vmem:[%s2843 + $0xc0] sm:$0xff] %v2892
                  %v2894 = vld [vmem:[%s2842 + $0xc8] sm:$0xff]
                  %2895 = vst [vmem:[%s2843 + $0xc8] sm:$0xff] %v2894
                  %v2896 = vld [vmem:[%s2842 + $0xd0] sm:$0xff]
                  %2897 = vst [vmem:[%s2843 + $0xd0] sm:$0xff] %v2896
                  %v2898 = vld [vmem:[%s2842 + $0xd8] sm:$0xff]
                  %2899 = vst [vmem:[%s2843 + $0xd8] sm:$0xff] %v2898
                  %v2900 = vld [vmem:[%s2842 + $0xe0] sm:$0xff]
                  %2901 = vst [vmem:[%s2843 + $0xe0] sm:$0xff] %v2900
                  %v2902 = vld [vmem:[%s2842 + $0xe8] sm:$0xff]
                  %2903 = vst [vmem:[%s2843 + $0xe8] sm:$0xff] %v2902
                  %v2904 = vld [vmem:[%s2842 + $0xf0] sm:$0xff]
                  %2905 = vst [vmem:[%s2843 + $0xf0] sm:$0xff] %v2904
                  %v2906 = vld [vmem:[%s2842 + $0xf8] sm:$0xff]
                  %2907 = vst [vmem:[%s2843 + $0xf8] sm:$0xff] %v2906
                  %v2908 = vld [vmem:[%s2842 + $0x100] sm:$0xff]
                  %2909 = vst [vmem:[%s2843 + $0x100] sm:$0xff] %v2908
                  %v2910 = vld [vmem:[%s2842 + $0x108] sm:$0xff]
                  %2911 = vst [vmem:[%s2843 + $0x108] sm:$0xff] %v2910
                  %v2912 = vld [vmem:[%s2842 + $0x110] sm:$0xff]
                  %2913 = vst [vmem:[%s2843 + $0x110] sm:$0xff] %v2912
                  %v2914 = vld [vmem:[%s2842 + $0x118] sm:$0xff]
                  %2915 = vst [vmem:[%s2843 + $0x118] sm:$0xff] %v2914
                  %v2916 = vld [vmem:[%s2842 + $0x120] sm:$0xff]
                  %2917 = vst [vmem:[%s2843 + $0x120] sm:$0xff] %v2916
                  %v2918 = vld [vmem:[%s2842 + $0x128] sm:$0xff]
                  %2919 = vst [vmem:[%s2843 + $0x128] sm:$0xff] %v2918
                  %v2920 = vld [vmem:[%s2842 + $0x130] sm:$0xff]
                  %2921 = vst [vmem:[%s2843 + $0x130] sm:$0xff] %v2920
                  %v2922 = vld [vmem:[%s2842 + $0x138] sm:$0xff]
                  %2923 = vst [vmem:[%s2843 + $0x138] sm:$0xff] %v2922
                  %v2924 = vld [vmem:[%s2842 + $0x140] sm:$0xff]
                  %2925 = vst [vmem:[%s2843 + $0x140] sm:$0xff] %v2924
                  %v2926 = vld [vmem:[%s2842 + $0x148] sm:$0xff]
                  %2927 = vst [vmem:[%s2843 + $0x148] sm:$0xff] %v2926
                  %v2928 = vld [vmem:[%s2842 + $0x150] sm:$0xff]
                  %2929 = vst [vmem:[%s2843 + $0x150] sm:$0xff] %v2928
                  %v2930 = vld [vmem:[%s2842 + $0x158] sm:$0xff]
                  %2931 = vst [vmem:[%s2843 + $0x158] sm:$0xff] %v2930
                  %v2932 = vld [vmem:[%s2842 + $0x160] sm:$0xff]
                  %2933 = vst [vmem:[%s2843 + $0x160] sm:$0xff] %v2932
                  %v2934 = vld [vmem:[%s2842 + $0x168] sm:$0xff]
                  %2935 = vst [vmem:[%s2843 + $0x168] sm:$0xff] %v2934
                  %v2936 = vld [vmem:[%s2842 + $0x170] sm:$0xff]
                  %2937 = vst [vmem:[%s2843 + $0x170] sm:$0xff] %v2936
                  %v2938 = vld [vmem:[%s2842 + $0x178] sm:$0xff]
                  %2939 = vst [vmem:[%s2843 + $0x178] sm:$0xff] %v2938
                  %v2940 = vld [vmem:[%s2842 + $0x180] sm:$0xff]
                  %2941 = vst [vmem:[%s2843 + $0x180] sm:$0xff] %v2940
                  %v2942 = vld [vmem:[%s2842 + $0x188] sm:$0xff]
                  %2943 = vst [vmem:[%s2843 + $0x188] sm:$0xff] %v2942
                  %v2944 = vld [vmem:[%s2842 + $0x190] sm:$0xff]
                  %2945 = vst [vmem:[%s2843 + $0x190] sm:$0xff] %v2944
                  %v2946 = vld [vmem:[%s2842 + $0x198] sm:$0xff]
                  %2947 = vst [vmem:[%s2843 + $0x198] sm:$0xff] %v2946
                  %v2948 = vld [vmem:[%s2842 + $0x1a0] sm:$0xff]
                  %2949 = vst [vmem:[%s2843 + $0x1a0] sm:$0xff] %v2948
                  %v2950 = vld [vmem:[%s2842 + $0x1a8] sm:$0xff]
                  %2951 = vst [vmem:[%s2843 + $0x1a8] sm:$0xff] %v2950
                  %v2952 = vld [vmem:[%s2842 + $0x1b0] sm:$0xff]
                  %2953 = vst [vmem:[%s2843 + $0x1b0] sm:$0xff] %v2952
                  %v2954 = vld [vmem:[%s2842 + $0x1b8] sm:$0xff]
                  %2955 = vst [vmem:[%s2843 + $0x1b8] sm:$0xff] %v2954
                  %v2956 = vld [vmem:[%s2842 + $0x1c0] sm:$0xff]
                  %2957 = vst [vmem:[%s2843 + $0x1c0] sm:$0xff] %v2956
                  %v2958 = vld [vmem:[%s2842 + $0x1c8] sm:$0xff]
                  %2959 = vst [vmem:[%s2843 + $0x1c8] sm:$0xff] %v2958
                  %v2960 = vld [vmem:[%s2842 + $0x1d0] sm:$0xff]
                  %2961 = vst [vmem:[%s2843 + $0x1d0] sm:$0xff] %v2960
                  %v2962 = vld [vmem:[%s2842 + $0x1d8] sm:$0xff]
                  %2963 = vst [vmem:[%s2843 + $0x1d8] sm:$0xff] %v2962
                  %v2964 = vld [vmem:[%s2842 + $0x1e0] sm:$0xff]
                  %2965 = vst [vmem:[%s2843 + $0x1e0] sm:$0xff] %v2964
                  %v2966 = vld [vmem:[%s2842 + $0x1e8] sm:$0xff]
                  %2967 = vst [vmem:[%s2843 + $0x1e8] sm:$0xff] %v2966
                  %v2968 = vld [vmem:[%s2842 + $0x1f0] sm:$0xff]
                  %2969 = vst [vmem:[%s2843 + $0x1f0] sm:$0xff] %v2968
                  %v2970 = vld [vmem:[%s2842 + $0x1f8] sm:$0xff]
                  %2971 = vst [vmem:[%s2843 + $0x1f8] sm:$0xff] %v2970
                  %s2972 = sadd.s32 1, %s2841
                  %p2973 = scmp.ge.s32.totalorder %s2972, %s2834
                  %s2974 = scalar_select %p2973, 0, %s2972
                  %s2975 = smul.u32 %s2974, 512
                  %s2976 = smul.u32 %s2974, 512
                  %s2977 = scalar_lea.vmem %s2642, %s2975 [#allocation2]
                  %s2978 = scalar_lea.vmem %s2653, %s2976
                $region87: #{net_forward.1} parent=81 // loop_footer
                  %s2838 = sadd.s32 %s2836, 1
                $region88: #{net_forward.1} parent=81 // loop_footer_branch
                  %2835 = sbr.rel target = $region84
                $region89: #{net_forward.1} parent=81 // loop_exit
                  _
                %s2979 = sshrl.u32 %s2649, 6
                %s2980 = sand.u32 %s2649, 63
                %s2981 = smul.u32 %s2979, 64
                %s2982 = smul.u32 8, %s2981
                %s2983 = scalar_lea.vmem %s2642, %s2982 [#allocation2]
                %s2984 = smul.u32 8, %s2981
                %s2985 = scalar_lea.vmem %s2653, %s2984
                // While loop
                $region90: #{net_forward.1} parent=81 // loop_pre_header
                  _
                $region91: #{net_forward.1} parent=81 // loop_header
                  %s2987 = sphi 0, %s2989
                  %p2988 = scmp.ge.s32.totalorder %s2987, %s2980
                  %s2992 = sphi 0, %s2999
                  %s2993 = sphi %s2983, %s3002
                  %s2994 = sphi %s2985, %s3003
                $region92: #{net_forward.1} parent=81 // loop_header_branch
                  %2991 = sbr.rel (%p2988) target = $region96
                $region93: #{net_forward.1} parent=81 // loop_body
                  %v2995 = vld [vmem:[%s2993] sm:$0xff]
                  %2996 = vst [vmem:[%s2994] sm:$0xff] %v2995
                  %s2997 = sadd.s32 1, %s2992
                  %p2998 = scmp.ge.s32.totalorder %s2997, %s2980
                  %s2999 = scalar_select %p2998, 0, %s2997
                  %s3000 = smul.u32 %s2999, 8
                  %s3001 = smul.u32 %s2999, 8
                  %s3002 = scalar_lea.vmem %s2983, %s3000 [#allocation2]
                  %s3003 = scalar_lea.vmem %s2985, %s3001
                $region94: #{net_forward.1} parent=81 // loop_footer
                  %s2989 = sadd.s32 %s2987, 1
                $region95: #{net_forward.1} parent=81 // loop_footer_branch
                  %2986 = sbr.rel target = $region91
                $region96: #{net_forward.1} parent=81 // loop_exit
                  _
              $region82: #{net_forward.1} parent=59 // pred_fallthru
                _
              // Predicated region
              $region97: #{net_forward.1} parent=59 // pred_check
                _
              $region98: #{net_forward.1} parent=59 // pred_check_branch
                %3005 = sbr.rel target = $region100
              $region99: #{net_forward.1} parent=59 // pred_region
                _
              $region100: #{net_forward.1} parent=59 // pred_fallthru
                _
            $region60: #{net_forward.1} parent=55 // pred_fallthru
              _
            // Predicated region
            $region61: #{net_forward.1} parent=55 // pred_check
              _
            $region62: #{net_forward.1} parent=55 // pred_check_branch
              %2660 = sbr.rel target = $region64
            $region63: #{net_forward.1} parent=55 // pred_region
              %s2662 = sshrl.u32 %s2649, 6
              // While loop
              $region65: #{net_forward.1} parent=63 // loop_pre_header
                _
              $region66: #{net_forward.1} parent=63 // loop_header
                %s2664 = sphi 0, %s2666
                %p2665 = scmp.ge.s32.totalorder %s2664, %s2662
                %s2669 = sphi 0, %s2802
                %s2670 = sphi %s2642, %s2805
                %s2671 = sphi %s2653, %s2806
              $region67: #{net_forward.1} parent=63 // loop_header_branch
                %2668 = sbr.rel (%p2665) target = $region71
              $region68: #{net_forward.1} parent=63 // loop_body
                %v2672 = vld [vmem:[%s2670] sm:$0xff]
                %2673 = vst [vmem:[%s2671] sm:$0xff] %v2672
                %v2674 = vld [vmem:[%s2670 + $0x8] sm:$0xff]
                %2675 = vst [vmem:[%s2671 + $0x8] sm:$0xff] %v2674
                %v2676 = vld [vmem:[%s2670 + $0x10] sm:$0xff]
                %2677 = vst [vmem:[%s2671 + $0x10] sm:$0xff] %v2676
                %v2678 = vld [vmem:[%s2670 + $0x18] sm:$0xff]
                %2679 = vst [vmem:[%s2671 + $0x18] sm:$0xff] %v2678
                %v2680 = vld [vmem:[%s2670 + $0x20] sm:$0xff]
                %2681 = vst [vmem:[%s2671 + $0x20] sm:$0xff] %v2680
                %v2682 = vld [vmem:[%s2670 + $0x28] sm:$0xff]
                %2683 = vst [vmem:[%s2671 + $0x28] sm:$0xff] %v2682
                %v2684 = vld [vmem:[%s2670 + $0x30] sm:$0xff]
                %2685 = vst [vmem:[%s2671 + $0x30] sm:$0xff] %v2684
                %v2686 = vld [vmem:[%s2670 + $0x38] sm:$0xff]
                %2687 = vst [vmem:[%s2671 + $0x38] sm:$0xff] %v2686
                %v2688 = vld [vmem:[%s2670 + $0x40] sm:$0xff]
                %2689 = vst [vmem:[%s2671 + $0x40] sm:$0xff] %v2688
                %v2690 = vld [vmem:[%s2670 + $0x48] sm:$0xff]
                %2691 = vst [vmem:[%s2671 + $0x48] sm:$0xff] %v2690
                %v2692 = vld [vmem:[%s2670 + $0x50] sm:$0xff]
                %2693 = vst [vmem:[%s2671 + $0x50] sm:$0xff] %v2692
                %v2694 = vld [vmem:[%s2670 + $0x58] sm:$0xff]
                %2695 = vst [vmem:[%s2671 + $0x58] sm:$0xff] %v2694
                %v2696 = vld [vmem:[%s2670 + $0x60] sm:$0xff]
                %2697 = vst [vmem:[%s2671 + $0x60] sm:$0xff] %v2696
                %v2698 = vld [vmem:[%s2670 + $0x68] sm:$0xff]
                %2699 = vst [vmem:[%s2671 + $0x68] sm:$0xff] %v2698
                %v2700 = vld [vmem:[%s2670 + $0x70] sm:$0xff]
                %2701 = vst [vmem:[%s2671 + $0x70] sm:$0xff] %v2700
                %v2702 = vld [vmem:[%s2670 + $0x78] sm:$0xff]
                %2703 = vst [vmem:[%s2671 + $0x78] sm:$0xff] %v2702
                %v2704 = vld [vmem:[%s2670 + $0x80] sm:$0xff]
                %2705 = vst [vmem:[%s2671 + $0x80] sm:$0xff] %v2704
                %v2706 = vld [vmem:[%s2670 + $0x88] sm:$0xff]
                %2707 = vst [vmem:[%s2671 + $0x88] sm:$0xff] %v2706
                %v2708 = vld [vmem:[%s2670 + $0x90] sm:$0xff]
                %2709 = vst [vmem:[%s2671 + $0x90] sm:$0xff] %v2708
                %v2710 = vld [vmem:[%s2670 + $0x98] sm:$0xff]
                %2711 = vst [vmem:[%s2671 + $0x98] sm:$0xff] %v2710
                %v2712 = vld [vmem:[%s2670 + $0xa0] sm:$0xff]
                %2713 = vst [vmem:[%s2671 + $0xa0] sm:$0xff] %v2712
                %v2714 = vld [vmem:[%s2670 + $0xa8] sm:$0xff]
                %2715 = vst [vmem:[%s2671 + $0xa8] sm:$0xff] %v2714
                %v2716 = vld [vmem:[%s2670 + $0xb0] sm:$0xff]
                %2717 = vst [vmem:[%s2671 + $0xb0] sm:$0xff] %v2716
                %v2718 = vld [vmem:[%s2670 + $0xb8] sm:$0xff]
                %2719 = vst [vmem:[%s2671 + $0xb8] sm:$0xff] %v2718
                %v2720 = vld [vmem:[%s2670 + $0xc0] sm:$0xff]
                %2721 = vst [vmem:[%s2671 + $0xc0] sm:$0xff] %v2720
                %v2722 = vld [vmem:[%s2670 + $0xc8] sm:$0xff]
                %2723 = vst [vmem:[%s2671 + $0xc8] sm:$0xff] %v2722
                %v2724 = vld [vmem:[%s2670 + $0xd0] sm:$0xff]
                %2725 = vst [vmem:[%s2671 + $0xd0] sm:$0xff] %v2724
                %v2726 = vld [vmem:[%s2670 + $0xd8] sm:$0xff]
                %2727 = vst [vmem:[%s2671 + $0xd8] sm:$0xff] %v2726
                %v2728 = vld [vmem:[%s2670 + $0xe0] sm:$0xff]
                %2729 = vst [vmem:[%s2671 + $0xe0] sm:$0xff] %v2728
                %v2730 = vld [vmem:[%s2670 + $0xe8] sm:$0xff]
                %2731 = vst [vmem:[%s2671 + $0xe8] sm:$0xff] %v2730
                %v2732 = vld [vmem:[%s2670 + $0xf0] sm:$0xff]
                %2733 = vst [vmem:[%s2671 + $0xf0] sm:$0xff] %v2732
                %v2734 = vld [vmem:[%s2670 + $0xf8] sm:$0xff]
                %2735 = vst [vmem:[%s2671 + $0xf8] sm:$0xff] %v2734
                %v2736 = vld [vmem:[%s2670 + $0x100] sm:$0xff]
                %2737 = vst [vmem:[%s2671 + $0x100] sm:$0xff] %v2736
                %v2738 = vld [vmem:[%s2670 + $0x108] sm:$0xff]
                %2739 = vst [vmem:[%s2671 + $0x108] sm:$0xff] %v2738
                %v2740 = vld [vmem:[%s2670 + $0x110] sm:$0xff]
                %2741 = vst [vmem:[%s2671 + $0x110] sm:$0xff] %v2740
                %v2742 = vld [vmem:[%s2670 + $0x118] sm:$0xff]
                %2743 = vst [vmem:[%s2671 + $0x118] sm:$0xff] %v2742
                %v2744 = vld [vmem:[%s2670 + $0x120] sm:$0xff]
                %2745 = vst [vmem:[%s2671 + $0x120] sm:$0xff] %v2744
                %v2746 = vld [vmem:[%s2670 + $0x128] sm:$0xff]
                %2747 = vst [vmem:[%s2671 + $0x128] sm:$0xff] %v2746
                %v2748 = vld [vmem:[%s2670 + $0x130] sm:$0xff]
                %2749 = vst [vmem:[%s2671 + $0x130] sm:$0xff] %v2748
                %v2750 = vld [vmem:[%s2670 + $0x138] sm:$0xff]
                %2751 = vst [vmem:[%s2671 + $0x138] sm:$0xff] %v2750
                %v2752 = vld [vmem:[%s2670 + $0x140] sm:$0xff]
                %2753 = vst [vmem:[%s2671 + $0x140] sm:$0xff] %v2752
                %v2754 = vld [vmem:[%s2670 + $0x148] sm:$0xff]
                %2755 = vst [vmem:[%s2671 + $0x148] sm:$0xff] %v2754
                %v2756 = vld [vmem:[%s2670 + $0x150] sm:$0xff]
                %2757 = vst [vmem:[%s2671 + $0x150] sm:$0xff] %v2756
                %v2758 = vld [vmem:[%s2670 + $0x158] sm:$0xff]
                %2759 = vst [vmem:[%s2671 + $0x158] sm:$0xff] %v2758
                %v2760 = vld [vmem:[%s2670 + $0x160] sm:$0xff]
                %2761 = vst [vmem:[%s2671 + $0x160] sm:$0xff] %v2760
                %v2762 = vld [vmem:[%s2670 + $0x168] sm:$0xff]
                %2763 = vst [vmem:[%s2671 + $0x168] sm:$0xff] %v2762
                %v2764 = vld [vmem:[%s2670 + $0x170] sm:$0xff]
                %2765 = vst [vmem:[%s2671 + $0x170] sm:$0xff] %v2764
                %v2766 = vld [vmem:[%s2670 + $0x178] sm:$0xff]
                %2767 = vst [vmem:[%s2671 + $0x178] sm:$0xff] %v2766
                %v2768 = vld [vmem:[%s2670 + $0x180] sm:$0xff]
                %2769 = vst [vmem:[%s2671 + $0x180] sm:$0xff] %v2768
                %v2770 = vld [vmem:[%s2670 + $0x188] sm:$0xff]
                %2771 = vst [vmem:[%s2671 + $0x188] sm:$0xff] %v2770
                %v2772 = vld [vmem:[%s2670 + $0x190] sm:$0xff]
                %2773 = vst [vmem:[%s2671 + $0x190] sm:$0xff] %v2772
                %v2774 = vld [vmem:[%s2670 + $0x198] sm:$0xff]
                %2775 = vst [vmem:[%s2671 + $0x198] sm:$0xff] %v2774
                %v2776 = vld [vmem:[%s2670 + $0x1a0] sm:$0xff]
                %2777 = vst [vmem:[%s2671 + $0x1a0] sm:$0xff] %v2776
                %v2778 = vld [vmem:[%s2670 + $0x1a8] sm:$0xff]
                %2779 = vst [vmem:[%s2671 + $0x1a8] sm:$0xff] %v2778
                %v2780 = vld [vmem:[%s2670 + $0x1b0] sm:$0xff]
                %2781 = vst [vmem:[%s2671 + $0x1b0] sm:$0xff] %v2780
                %v2782 = vld [vmem:[%s2670 + $0x1b8] sm:$0xff]
                %2783 = vst [vmem:[%s2671 + $0x1b8] sm:$0xff] %v2782
                %v2784 = vld [vmem:[%s2670 + $0x1c0] sm:$0xff]
                %2785 = vst [vmem:[%s2671 + $0x1c0] sm:$0xff] %v2784
                %v2786 = vld [vmem:[%s2670 + $0x1c8] sm:$0xff]
                %2787 = vst [vmem:[%s2671 + $0x1c8] sm:$0xff] %v2786
                %v2788 = vld [vmem:[%s2670 + $0x1d0] sm:$0xff]
                %2789 = vst [vmem:[%s2671 + $0x1d0] sm:$0xff] %v2788
                %v2790 = vld [vmem:[%s2670 + $0x1d8] sm:$0xff]
                %2791 = vst [vmem:[%s2671 + $0x1d8] sm:$0xff] %v2790
                %v2792 = vld [vmem:[%s2670 + $0x1e0] sm:$0xff]
                %2793 = vst [vmem:[%s2671 + $0x1e0] sm:$0xff] %v2792
                %v2794 = vld [vmem:[%s2670 + $0x1e8] sm:$0xff]
                %2795 = vst [vmem:[%s2671 + $0x1e8] sm:$0xff] %v2794
                %v2796 = vld [vmem:[%s2670 + $0x1f0] sm:$0xff]
                %2797 = vst [vmem:[%s2671 + $0x1f0] sm:$0xff] %v2796
                %v2798 = vld [vmem:[%s2670 + $0x1f8] sm:$0xff]
                %2799 = vst [vmem:[%s2671 + $0x1f8] sm:$0xff] %v2798
                %s2800 = sadd.s32 1, %s2669
                %p2801 = scmp.ge.s32.totalorder %s2800, %s2662
                %s2802 = scalar_select %p2801, 0, %s2800
                %s2803 = smul.u32 %s2802, 512
                %s2804 = smul.u32 %s2802, 512
                %s2805 = scalar_lea.vmem %s2642, %s2803 [#allocation2]
                %s2806 = scalar_lea.vmem %s2653, %s2804
              $region69: #{net_forward.1} parent=63 // loop_footer
                %s2666 = sadd.s32 %s2664, 1
              $region70: #{net_forward.1} parent=63 // loop_footer_branch
                %2663 = sbr.rel target = $region66
              $region71: #{net_forward.1} parent=63 // loop_exit
                _
              %s2807 = sshrl.u32 %s2649, 6
              %s2808 = sand.u32 %s2649, 63
              %s2809 = smul.u32 %s2807, 64
              %s2810 = smul.u32 8, %s2809
              %s2811 = scalar_lea.vmem %s2642, %s2810 [#allocation2]
              %s2812 = smul.u32 8, %s2809
              %s2813 = scalar_lea.vmem %s2653, %s2812
              // While loop
              $region72: #{net_forward.1} parent=63 // loop_pre_header
                _
              $region73: #{net_forward.1} parent=63 // loop_header
                %s2815 = sphi 0, %s2817
                %p2816 = scmp.ge.s32.totalorder %s2815, %s2808
                %s2820 = sphi 0, %s2827
                %s2821 = sphi %s2811, %s2830
                %s2822 = sphi %s2813, %s2831
              $region74: #{net_forward.1} parent=63 // loop_header_branch
                %2819 = sbr.rel (%p2816) target = $region78
              $region75: #{net_forward.1} parent=63 // loop_body
                %v2823 = vld [vmem:[%s2821] sm:$0xff]
                %2824 = vst [vmem:[%s2822] sm:$0xff] %v2823
                %s2825 = sadd.s32 1, %s2820
                %p2826 = scmp.ge.s32.totalorder %s2825, %s2808
                %s2827 = scalar_select %p2826, 0, %s2825
                %s2828 = smul.u32 %s2827, 8
                %s2829 = smul.u32 %s2827, 8
                %s2830 = scalar_lea.vmem %s2811, %s2828 [#allocation2]
                %s2831 = scalar_lea.vmem %s2813, %s2829
              $region76: #{net_forward.1} parent=63 // loop_footer
                %s2817 = sadd.s32 %s2815, 1
              $region77: #{net_forward.1} parent=63 // loop_footer_branch
                %2814 = sbr.rel target = $region73
              $region78: #{net_forward.1} parent=63 // loop_exit
                _
            $region64: #{net_forward.1} parent=55 // pred_fallthru
              _
          $region56: #{net_forward.1} parent=51 // pred_fallthru
            _
          %3006 = vnop
        $region52: #{net_forward.1} parent=47 // pred_fallthru
          _
      $region48: #{net_forward.1} parent=5 // pred_fallthru
        _
      %p3007 = scmp.le.s32.totalorder 2, %s13
      // Predicated region
      $region101: #{net_forward.1} parent=5 // pred_check
        %p3008 = pneg %p3007
      $region102: #{net_forward.1} parent=5 // pred_check_branch
        %3010 = sbr.rel (%p3008) target = $region104
      $region103: #{net_forward.1} parent=5 // pred_region
        %s3011 = ssub.s32 %s13, 2
        // Predicated region
        $region105: #{net_forward.1} parent=103 // pred_check
          %p3012 = pneg %p194
        $region106: #{net_forward.1} parent=103 // pred_check_branch
          %3014 = sbr.rel (%p3012) target = $region108
        $region107: #{net_forward.1} parent=103 // pred_region
          %s3015 = sand.u32 %s179, 1
          %s3016 = sand.u32 %s179, 1
          %s3017 = smul.addr %s3016, 512
          %s3018 = scalar_lea.vmem [#allocation2], %s3017
        $region108: #{net_forward.1} parent=103 // pred_fallthru
          _
      $region104: #{net_forward.1} parent=5 // pred_fallthru
        _
    $region6: #{net_forward.1} parent=1 // loop_footer
      %s17 = sadd.s32 1, %s13
    $region7: #{net_forward.1} parent=1 // loop_footer_branch
      %12 = sbr.rel target = $region3
    $region8: #{net_forward.1} parent=1 // loop_exit
      _

</llo_original>
